<compile_context>
chip_gen: v5e
topology: v5e:2x2
jax: 0.10.0
libtpu: 0.0.40
codegen_flags: <defaults>
</compile_context>

<pallas_src>
import functools
import numpy as np
import jax
import jax.numpy as jnp
from jax.experimental import pallas as pl
from jax.experimental.pallas import tpu as pltpu

_MIB = 1024 * 1024


# ----------------------------------------------------------------------------
# In-kernel helpers
# ----------------------------------------------------------------------------
def _layernorm(x, g, b, eps):
    # f32 LayerNorm over the last dim (PyTorch semantics: biased variance).
    mu = jnp.mean(x, axis=-1, keepdims=True)
    xc = x - mu
    var = jnp.mean(xc * xc, axis=-1, keepdims=True)
    return xc * jax.lax.rsqrt(var + eps) * g + b


def _bf16(x):
    return x.astype(jnp.bfloat16)


def _vmem_capacity_bytes():
    # Per-generation VMEM (v5e/v6e: 128 MiB, v7x: 64 MiB per TensorCore).
    # Fall back to the smallest (v7x) so tiling never assumes more than any
    # target generation physically has.
    try:
        return int(pltpu.get_tpu_info().vmem_capacity_bytes)
    except Exception:
        return 64 * _MIB


# ----------------------------------------------------------------------------
# Fused transformer kernel: one (batch-tile, layer) step per grid point.
# ----------------------------------------------------------------------------
def _perceiver_kernel(
    x_ref, bias_ref,
    ln1_g_ref, ln1_b_ref, w_qkv_ref,
    w_ao_ref, b_ao_ref,
    ln2_g_ref, ln2_b_ref,
    w_ff1_ref, b_ff1_ref, w_ff2_ref, b_ff2_ref,
    lnf_g_ref, lnf_b_ref,
    o_ref,
    *, bt, seq, heads, dim_head, scale, eps):
    layer = pl.program_id(1)
    last = pl.num_programs(1) - 1
    inner = heads * dim_head

    # Residual stream lives in the resident output block (its block index is
    # constant across the depth axis): init once per batch tile, single HBM
    # writeback at the end of the depth loop.
    @pl.when(layer == 0)
    def _():
        o_ref[...] = x_ref[...]

    x = o_ref[...]                                              # (Bt*N, D) f32

    # ---- PreNorm + multi-head attention -------------------------------------
    h1 = _layernorm(x, ln1_g_ref[...], ln1_b_ref[...], eps)
    qkv = jnp.dot(_bf16(h1), w_qkv_ref[...],
                  preferred_element_type=jnp.float32)           # (Bt*N, 3*inner)
    q = qkv[:, :inner]
    k = qkv[:, inner:2 * inner]
    v = qkv[:, 2 * inner:]

    # Per-(batch-in-tile, head) attention.  Head outputs are concatenated
    # lane-wise in VMEM so the output projection is ONE (Bt*N, inner)@(inner, D)
    # matmul instead of `heads` K=dim_head matmuls.
    # TODO(synk): at production N replace the full (N, N) score tile with a
    # kv-tiled / flash-attention loop (running max/sum) -- mandatory on v7x.
    # TODO(synk): per-head lane slices (dim_head < 128) still relayout; pad
    # dim_head toward 128 or use a per-head weight layout at production dims.
    tiles = []
    for b in range(bt):
        rs = slice(b * seq, (b + 1) * seq)
        bias_b = bias_ref[b]                                    # (1, N) additive mask bias
        outs = []
        for h in range(heads):
            cs = slice(h * dim_head, (h + 1) * dim_head)
            qh, kh, vh = q[rs, cs], k[rs, cs], v[rs, cs]
            sim = jax.lax.dot_general(_bf16(qh), _bf16(kh),
                                      (((1,), (1,)), ((), ())),
                                      preferred_element_type=jnp.float32)
            sim = sim * scale + bias_b                          # add, no compare/select
            row_max = jnp.max(sim, axis=-1, keepdims=True)
            p = jnp.exp(sim - row_max)
            denom = jnp.sum(p, axis=-1, keepdims=True)
            attn = p * pl.reciprocal(denom, approx=True)        # EUP vrcp
            # TODO(synk): dropout(p=0.0) is the identity; nonzero rate would use pltpu.prng_*.
            outs.append(jnp.dot(_bf16(attn), _bf16(vh),
                                preferred_element_type=jnp.float32))
        tiles.append(outs[0] if len(outs) == 1
                     else jnp.concatenate(outs, axis=-1))       # (N, inner)
    head_out = tiles[0] if len(tiles) == 1 else jnp.concatenate(tiles, axis=0)
    x = x + jnp.dot(_bf16(head_out), w_ao_ref[...],
                    preferred_element_type=jnp.float32) + b_ao_ref[...]

    # ---- PreNorm + FeedForward ----------------------------------------------
    h2 = _layernorm(x, ln2_g_ref[...], ln2_b_ref[...], eps)
    f = jnp.dot(_bf16(h2), w_ff1_ref[...],
                preferred_element_type=jnp.float32) + b_ff1_ref[...]
    # TODO(synk): PyTorch nn.GELU() is the exact erf form; tanh approximation used here.
    f = jax.nn.gelu(f, approximate=True)
    x = x + jnp.dot(_bf16(f), w_ff2_ref[...],
                    preferred_element_type=jnp.float32) + b_ff2_ref[...]

    @pl.when(layer < last)
    def _():
        o_ref[...] = x

    # Final LayerNorm written in place of the residual at the last layer only.
    @pl.when(layer == last)
    def _():
        o_ref[...] = _layernorm(x, lnf_g_ref[...], lnf_b_ref[...], eps)


# ----------------------------------------------------------------------------
# Module (forward only)
# ----------------------------------------------------------------------------
class PerceiverTransformer:
    def __init__(self, dim, *, depth, dim_head=8, heads=2, ff_mult=4,
                 add_cls=None, key=None):
        self.dim = dim
        self.depth = depth
        self.dim_head = dim_head
        self.heads = heads
        self.inner = dim_head * heads
        self.ff_dim = int(dim * ff_mult)
        self.scale = dim_head ** (-0.5)
        self.eps = 1e-5
        self.add_cls = add_cls
        # TODO(synk): positional=True path (PositionalEncoding1D) not implemented.
        # TODO(synk): return_attention=True (materializing B,H,N,N maps) not implemented.

        if key is None:
            key = jax.random.PRNGKey(0)
        ks = jax.random.split(key, 14)
        D, I, F, L = dim, self.inner, self.ff_dim, depth
        normal = jax.random.normal

        # LayerNorm affine params (f32); slightly randomized so the affine path is tested.
        self.ln1_g = 1.0 + 0.1 * normal(ks[0], (L, 1, D), jnp.float32)
        self.ln1_b = 0.05 * normal(ks[1], (L, 1, D), jnp.float32)
        self.ln2_g = 1.0 + 0.1 * normal(ks[2], (L, 1, D), jnp.float32)
        self.ln2_b = 0.05 * normal(ks[3], (L, 1, D), jnp.float32)
        self.lnf_g = 1.0 + 0.1 * normal(ks[4], (1, D), jnp.float32)
        self.lnf_b = 0.05 * normal(ks[5], (1, D), jnp.float32)

        # Linear weights stored pre-transposed (x @ W) in bf16 (MXU operands);
        # biases stay f32 (added into f32 accumulators).
        self.w_qkv = (normal(ks[6], (L, D, 3 * I), jnp.float32) / np.sqrt(D)).astype(jnp.bfloat16)
        self.w_ao = (normal(ks[7], (L, I, D), jnp.float32) / np.sqrt(I)).astype(jnp.bfloat16)
        self.b_ao = 0.02 * normal(ks[8], (L, 1, D), jnp.float32)
        self.w_ff1 = (normal(ks[9], (L, D, F), jnp.float32) / np.sqrt(D)).astype(jnp.bfloat16)
        self.b_ff1 = 0.02 * normal(ks[10], (L, 1, F), jnp.float32)
        self.w_ff2 = (normal(ks[11], (L, F, D), jnp.float32) / np.sqrt(F)).astype(jnp.bfloat16)
        self.b_ff2 = 0.02 * normal(ks[12], (L, 1, D), jnp.float32)
        if add_cls is not None:
            self.cls_token = normal(ks[13], (add_cls, D), jnp.float32)

    # ---- host-side prep ------------------------------------------------------
    def _prep(self, x, mask):
        if self.add_cls is not None:
            b = x.shape[0]
            cls = jnp.broadcast_to(self.cls_token[None], (b,) + self.cls_token.shape)
            x = jnp.concatenate([cls, x], axis=1)
            if mask is not None:
                mask = jnp.pad(mask, ((0, 0), (self.add_cls, 0)), constant_values=True)
        return x, mask

    # ---- tiling heuristics ---------------------------------------------------
    def _workset_bytes(self, bt, n):
        """Rough per-grid-step VMEM working set for a batch tile of bt rows."""
        D, I, F, H = self.dim, self.inner, self.ff_dim, self.heads
        rows = bt * n
        f32, bf16 = 4, 2
        io = 2 * 2 * rows * D * f32                                # x + out blocks, double-buffered
        msk = 2 * bt * n * f32                                     # additive mask bias
        w = 2 * bf16 * (D * 3 * I + I * D + D * F + F * D)         # bf16 weights, double-buffered
        small = 2 * f32 * (7 * D + 2 * F)                          # LN params + biases
        act = f32 * rows * (D + 3 * I + I + F) + f32 * H * n * n   # live activations (approx)
        return io + msk + w + small + act

    def _pick_batch_tile(self, B, n, budget):
        def ok(bt):
            # BlockSpec constraint: second-to-last block dim must be a multiple
            # of 8 (sublanes) unless it equals the full array extent.
            return bt == B or (bt * n) % 8 == 0
        divs = [d for d in range(1, B + 1) if B % d == 0 and ok(d)]
        fits = [d for d in divs if self._workset_bytes(d, n) <= budget] or [min(divs)]
        bt = max(fits)
        # Keep the parallel batch axis >= 2 blocks when possible (v7x has two
        # TensorCores sharing the grid along the "parallel" axis).
        if B // bt < 2:
            two = [d for d in fits if B // d >= 2]
            if two:
                bt = max(two)
        return bt

    # ---- forward -------------------------------------------------------------
    def __call__(self, x, mask=None):
        x, mask = self._prep(x, mask)
        B, N, D = x.shape
        if mask is None:
            keep = jnp.ones((B, N), jnp.float32)
        else:
            keep = mask.astype(jnp.float32)
        # Additive mask bias precomputed on the host: 0 keep / -1e30 drop.
        bias = ((keep - 1.0) * jnp.float32(1e30)).reshape(B, 1, N)

        I, F, L = self.inner, self.ff_dim, self.depth
        cap = _vmem_capacity_bytes()
        budget = min(int(cap * 0.55), 44 * _MIB)          # v7x-safe ceiling
        bt = self._pick_batch_tile(B, N, budget)
        est = self._workset_bytes(bt, N)
        vmem_limit = int(min(max(est * 5 // 4, 32 * _MIB), 56 * _MIB))

        rows = bt * N
        x_flat = x.astype(jnp.float32).reshape(B * N, D)  # lane-dense 2-D slab

        kernel = functools.partial(
            _perceiver_kernel, bt=bt, seq=N, heads=self.heads,
            dim_head=self.dim_head, scale=self.scale, eps=self.eps)

        row_map = lambda i, l: (i, 0)          # batch-tile rows, constant over layers
        tile_map = lambda i, l: (i, 0, 0)      # per-batch-tile mask bias
        layer_map = lambda i, l: (l, 0, 0)     # per-layer weights
        const_map = lambda i, l: (0, 0)        # final LayerNorm params

        out = pl.pallas_call(
            kernel,
            out_shape=jax.ShapeDtypeStruct((B * N, D), jnp.float32),
            grid=(B // bt, L),
            in_specs=[
                pl.BlockSpec((rows, D), row_map),             # x (f32)
                pl.BlockSpec((bt, 1, N), tile_map),           # additive mask bias
                pl.BlockSpec((None, 1, D), layer_map),        # ln1 gamma
                pl.BlockSpec((None, 1, D), layer_map),        # ln1 beta
                pl.BlockSpec((None, D, 3 * I), layer_map),    # W_qkv (bf16)
                pl.BlockSpec((None, I, D), layer_map),        # W_attn_out (bf16)
                pl.BlockSpec((None, 1, D), layer_map),        # b_attn_out
                pl.BlockSpec((None, 1, D), layer_map),        # ln2 gamma
                pl.BlockSpec((None, 1, D), layer_map),        # ln2 beta
                pl.BlockSpec((None, D, F), layer_map),        # W_ff1 (bf16)
                pl.BlockSpec((None, 1, F), layer_map),        # b_ff1
                pl.BlockSpec((None, F, D), layer_map),        # W_ff2 (bf16)
                pl.BlockSpec((None, 1, D), layer_map),        # b_ff2
                pl.BlockSpec((1, D), const_map),              # norm_out gamma
                pl.BlockSpec((1, D), const_map),              # norm_out beta
            ],
            out_specs=pl.BlockSpec((rows, D), row_map),       # resident residual stream
            compiler_params=pltpu.CompilerParams(
                dimension_semantics=("parallel", "arbitrary"),
                vmem_limit_bytes=vmem_limit),
        )(x_flat, bias,
          self.ln1_g, self.ln1_b, self.w_qkv,
          self.w_ao, self.b_ao,
          self.ln2_g, self.ln2_b,
          self.w_ff1, self.b_ff1, self.w_ff2, self.b_ff2,
          self.lnf_g, self.lnf_b)
        return out.reshape(B, N, D), None   # return_attention=False


# ----------------------------------------------------------------------------
# Pure-JAX reference (mimics the kernel precision policy: bf16 matmul operands,
# f32 accumulation, f32 softmax / LayerNorm) for validation.
# ----------------------------------------------------------------------------
def _ln_ref(x, g, b, eps=1e-5):
    mu = jnp.mean(x, axis=-1, keepdims=True)
    xc = x - mu
    var = jnp.mean(xc * xc, axis=-1, keepdims=True)
    return xc * jax.lax.rsqrt(var + eps) * g + b


def _bdot(a, b):
    return jnp.dot(a.astype(jnp.bfloat16), b.astype(jnp.bfloat16),
                   preferred_element_type=jnp.float32)


def reference_forward(model, x, mask=None):
    x, mask = model._prep(x, mask)
    B, N, D = x.shape
    h, dh, inner = model.heads, model.dim_head, model.inner
    xs = x.astype(jnp.float32)
    keep = (jnp.ones((B, N), bool) if mask is None else mask).reshape(B, 1, 1, N)
    for l in range(model.depth):
        hn = _ln_ref(xs, model.ln1_g[l], model.ln1_b[l])
        qkv = _bdot(hn.reshape(B * N, D), model.w_qkv[l]).reshape(B, N, 3 * inner)
        q, k, v = jnp.split(qkv, 3, axis=-1)
        to_heads = lambda t: t.reshape(B, N, h, dh).transpose(0, 2, 1, 3)
        q, k, v = map(to_heads, (q, k, v))
        sim = jnp.einsum('bhid,bhjd->bhij', q.astype(jnp.bfloat16),
                         k.astype(jnp.bfloat16),
                         preferred_element_type=jnp.float32) * model.scale
        sim = jnp.where(keep, sim, -1e30)
        attn = jax.nn.softmax(sim, axis=-1)
        out = jnp.einsum('bhij,bhjd->bhid', attn.astype(jnp.bfloat16),
                         v.astype(jnp.bfloat16),
                         preferred_element_type=jnp.float32)
        out = out.transpose(0, 2, 1, 3).reshape(B * N, inner)
        out = (_bdot(out, model.w_ao[l]) + model.b_ao[l]).reshape(B, N, D)
        xs = xs + out
        hn2 = _ln_ref(xs, model.ln2_g[l], model.ln2_b[l])
        f = _bdot(hn2.reshape(B * N, D), model.w_ff1[l]) + model.b_ff1[l]
        f = jax.nn.gelu(f, approximate=True)
        f = (_bdot(f, model.w_ff2[l]) + model.b_ff2[l]).reshape(B, N, D)
        xs = xs + f
    return _ln_ref(xs, model.lnf_g, model.lnf_b)


if __name__ == "__main__":
    key = jax.random.PRNGKey(0)
    kx, km, kp = jax.random.split(key, 3)

    B, N, D = 4, 8, 32            # batch, seq, model dim
    depth, heads, dim_head, ff_mult = 2, 2, 8, 4   # inner=16, ff hidden=128

    x = jax.random.normal(kx, (B, N, D), jnp.float32)
    mask = jax.random.bernoulli(km, 0.8, (B, N))
    mask = mask.at[:, 0].set(True)   # keep at least one valid key per row

    model = PerceiverTransformer(D, depth=depth, dim_head=dim_head, heads=heads,
                                 ff_mult=ff_mult, key=kp)

    out, attn_ret = model(x, mask=mask)
    out = jax.block_until_ready(out)
    ref = reference_forward(model, x, mask=mask)
    np.testing.assert_allclose(np.asarray(out), np.asarray(ref), atol=2e-2, rtol=2e-2)

    # also exercise the mask=None path
    out2, _ = model(x, mask=None)
    out2 = jax.block_until_ready(out2)
    ref2 = reference_forward(model, x, mask=None)
    np.testing.assert_allclose(np.asarray(out2), np.asarray(ref2), atol=2e-2, rtol=2e-2)

    assert attn_ret is None
    print("KERNEL_OK")
</pallas_src>

<mosaic_0001>
module attributes {stable_mosaic.version = 11 : i64} {
  func.func @_perceiver_kernel(%arg0: i32, %arg1: i32, %arg2: memref<16x32xf32, #tpu.memory_space<vmem>>, %arg3: memref<2x1x8xf32, #tpu.memory_space<vmem>>, %arg4: memref<1x1x32xf32, #tpu.memory_space<vmem>>, %arg5: memref<1x1x32xf32, #tpu.memory_space<vmem>>, %arg6: memref<1x32x48xbf16, #tpu.memory_space<vmem>>, %arg7: memref<1x16x32xbf16, #tpu.memory_space<vmem>>, %arg8: memref<1x1x32xf32, #tpu.memory_space<vmem>>, %arg9: memref<1x1x32xf32, #tpu.memory_space<vmem>>, %arg10: memref<1x1x32xf32, #tpu.memory_space<vmem>>, %arg11: memref<1x32x128xbf16, #tpu.memory_space<vmem>>, %arg12: memref<1x1x128xf32, #tpu.memory_space<vmem>>, %arg13: memref<1x128x32xbf16, #tpu.memory_space<vmem>>, %arg14: memref<1x1x32xf32, #tpu.memory_space<vmem>>, %arg15: memref<1x32xf32, #tpu.memory_space<vmem>>, %arg16: memref<1x32xf32, #tpu.memory_space<vmem>>, %arg17: memref<16x32xf32, #tpu.memory_space<vmem>>) attributes {dimension_semantics = [#tpu.dimension_semantics<parallel>, #tpu.dimension_semantics<arbitrary>], iteration_bounds = array<i64: 2, 2>, scalar_prefetch = 0 : i64, scratch_operands = 0 : i64, tpu.core_type = #tpu.core_type<tc>, window_params = [{transform_indices = @transform_0, window_bounds = array<i64: 16, 32>}, {transform_indices = @transform_1, window_bounds = array<i64: 2, 1, 8>}, {transform_indices = @transform_2, window_bounds = array<i64: 1, 1, 32>}, {transform_indices = @transform_3, window_bounds = array<i64: 1, 1, 32>}, {transform_indices = @transform_4, window_bounds = array<i64: 1, 32, 48>}, {transform_indices = @transform_5, window_bounds = array<i64: 1, 16, 32>}, {transform_indices = @transform_6, window_bounds = array<i64: 1, 1, 32>}, {transform_indices = @transform_7, window_bounds = array<i64: 1, 1, 32>}, {transform_indices = @transform_8, window_bounds = array<i64: 1, 1, 32>}, {transform_indices = @transform_9, window_bounds = array<i64: 1, 32, 128>}, {transform_indices = @transform_10, window_bounds = array<i64: 1, 1, 128>}, {transform_indices = @transform_11, window_bounds = array<i64: 1, 128, 32>}, {transform_indices = @transform_12, window_bounds = array<i64: 1, 1, 32>}, {pipeline_mode = #tpu.pipeline_mode<synchronous>, transform_indices = @transform_13, window_bounds = array<i64: 1, 32>}, {pipeline_mode = #tpu.pipeline_mode<synchronous>, transform_indices = @transform_14, window_bounds = array<i64: 1, 32>}, {transform_indices = @transform_15, window_bounds = array<i64: 16, 32>}]} {
    %c0_i32 = arith.constant 0 : i32
    %0 = arith.cmpi eq, %arg1, %c0_i32 : i32
    %1 = arith.extui %0 : i1 to i32
    %c0_i32_0 = arith.constant 0 : i32
    %2 = arith.cmpi ne, %1, %c0_i32_0 : i32
    scf.if %2 {
      %c0_80 = arith.constant 0 : index
      %c0_81 = arith.constant 0 : index
      %203 = vector.load %arg2[%c0_80, %c0_81] : memref<16x32xf32, #tpu.memory_space<vmem>>, vector<16x32xf32>
      %c0_82 = arith.constant 0 : index
      %c0_83 = arith.constant 0 : index
      %204 = vector.load %arg17[%c0_82, %c0_83] : memref<16x32xf32, #tpu.memory_space<vmem>>, vector<16x32xf32>
      tpu.vector_store %arg17[%c0_82, %c0_83], %203 {strides = array<i32>} : memref<16x32xf32, #tpu.memory_space<vmem>>, vector<16x32xf32>,
    } else {
    }
    %c0 = arith.constant 0 : index
    %c0_1 = arith.constant 0 : index
    %3 = vector.load %arg17[%c0, %c0_1] : memref<16x32xf32, #tpu.memory_space<vmem>>, vector<16x32xf32>
    %c0_2 = arith.constant 0 : index
    %c0_3 = arith.constant 0 : index
    %c0_4 = arith.constant 0 : index
    %4 = vector.load %arg4[%c0_2, %c0_3, %c0_4] : memref<1x1x32xf32, #tpu.memory_space<vmem>>, vector<1x1x32xf32>
    %5 = vector.shape_cast %4 : vector<1x1x32xf32> to vector<1x32xf32>
    %c0_5 = arith.constant 0 : index
    %c0_6 = arith.constant 0 : index
    %c0_7 = arith.constant 0 : index
    %6 = vector.load %arg5[%c0_5, %c0_6, %c0_7] : memref<1x1x32xf32, #tpu.memory_space<vmem>>, vector<1x1x32xf32>
    %7 = vector.shape_cast %6 : vector<1x1x32xf32> to vector<1x32xf32>
    %cst = arith.constant dense<0.000000e+00> : vector<16xf32>
    %8 = vector.multi_reduction <add>, %3, %cst [1] : vector<16x32xf32> to vector<16xf32>
    %9 = vector.shape_cast %8 : vector<16xf32> to vector<16x1xf32>
    %cst_8 = arith.constant 3.200000e+01 : f32
    %10 = vector.broadcast %cst_8 : f32 to vector<16x1xf32>
    %11 = arith.divf %9, %10 : vector<16x1xf32>
    %12 = vector.broadcast %11 : vector<16x1xf32> to vector<16x32xf32>
    %13 = arith.subf %3, %12 : vector<16x32xf32>
    %14 = arith.mulf %13, %13 : vector<16x32xf32>
    %cst_9 = arith.constant dense<0.000000e+00> : vector<16xf32>
    %15 = vector.multi_reduction <add>, %14, %cst_9 [1] : vector<16x32xf32> to vector<16xf32>
    %16 = vector.shape_cast %15 : vector<16xf32> to vector<16x1xf32>
    %cst_10 = arith.constant 3.200000e+01 : f32
    %17 = vector.broadcast %cst_10 : f32 to vector<16x1xf32>
    %18 = arith.divf %16, %17 : vector<16x1xf32>
    %cst_11 = arith.constant 9.99999974E-6 : f32
    %19 = vector.broadcast %cst_11 : f32 to vector<16x1xf32>
    %20 = arith.addf %18, %19 : vector<16x1xf32>
    %21 = math.rsqrt %20 : vector<16x1xf32>
    %22 = vector.broadcast %21 : vector<16x1xf32> to vector<16x32xf32>
    %23 = arith.mulf %13, %22 : vector<16x32xf32>
    %24 = vector.broadcast %5 : vector<1x32xf32> to vector<16x32xf32>
    %25 = arith.mulf %23, %24 : vector<16x32xf32>
    %26 = vector.broadcast %7 : vector<1x32xf32> to vector<16x32xf32>
    %27 = arith.addf %25, %26 : vector<16x32xf32>
    %28 = arith.truncf %27 : vector<16x32xf32> to vector<16x32xbf16>
    %c0_12 = arith.constant 0 : index
    %c0_13 = arith.constant 0 : index
    %c0_14 = arith.constant 0 : index
    %29 = vector.load %arg6[%c0_12, %c0_13, %c0_14] : memref<1x32x48xbf16, #tpu.memory_space<vmem>>, vector<1x32x48xbf16>
    %30 = vector.shape_cast %29 : vector<1x32x48xbf16> to vector<32x48xbf16>
    %cst_15 = arith.constant dense<0.000000e+00> : vector<16x48xf32>
    %31 = tpu.matmul %28, %30, %cst_15 {dimension_numbers = #tpu.dot_dimension_numbers<[1], [0], [0], [1], [0, 0, 1, 1], [], []>} : vector<16x32xbf16>, vector<32x48xbf16>, vector<16x48xf32> -> vector<16x48xf32>
    %32 = vector.extract_strided_slice %31 {offsets = [0, 0], sizes = [16, 16], strides = [1, 1]} : vector<16x48xf32> to vector<16x16xf32>
    %33 = vector.extract_strided_slice %31 {offsets = [0, 16], sizes = [16, 16], strides = [1, 1]} : vector<16x48xf32> to vector<16x16xf32>
    %34 = vector.extract_strided_slice %31 {offsets = [0, 32], sizes = [16, 16], strides = [1, 1]} : vector<16x48xf32> to vector<16x16xf32>
    %c0_16 = arith.constant 0 : index
    %c0_17 = arith.constant 0 : index
    %c0_18 = arith.constant 0 : index
    %35 = vector.load %arg3[%c0_16, %c0_17, %c0_18] : memref<2x1x8xf32, #tpu.memory_space<vmem>>, vector<1x1x8xf32>
    %36 = vector.shape_cast %35 : vector<1x1x8xf32> to vector<1x8xf32>
    %37 = vector.extract_strided_slice %32 {offsets = [0, 0], sizes = [8, 8], strides = [1, 1]} : vector<16x16xf32> to vector<8x8xf32>
    %38 = vector.extract_strided_slice %33 {offsets = [0, 0], sizes = [8, 8], strides = [1, 1]} : vector<16x16xf32> to vector<8x8xf32>
    %39 = vector.extract_strided_slice %34 {offsets = [0, 0], sizes = [8, 8], strides = [1, 1]} : vector<16x16xf32> to vector<8x8xf32>
    %40 = arith.truncf %37 : vector<8x8xf32> to vector<8x8xbf16>
    %41 = arith.truncf %38 : vector<8x8xf32> to vector<8x8xbf16>
    %cst_19 = arith.constant dense<0.000000e+00> : vector<8x8xf32>
    %42 = tpu.matmul %40, %41, %cst_19 {dimension_numbers = #tpu.dot_dimension_numbers<[1], [1], [0], [0], [0, 0, 1, 0], [], []>} : vector<8x8xbf16>, vector<8x8xbf16>, vector<8x8xf32> -> vector<8x8xf32>
    %cst_20 = arith.constant 0.353553385 : f32
    %43 = vector.broadcast %cst_20 : f32 to vector<8x8xf32>
    %44 = arith.mulf %42, %43 : vector<8x8xf32>
    %45 = vector.broadcast %36 : vector<1x8xf32> to vector<8x8xf32>
    %46 = arith.addf %44, %45 : vector<8x8xf32>
    %cst_21 = arith.constant dense<0xFF800000> : vector<8xf32>
    %47 = vector.multi_reduction <maximumf>, %46, %cst_21 [1] : vector<8x8xf32> to vector<8xf32>
    %48 = vector.shape_cast %47 : vector<8xf32> to vector<8x1xf32>
    %49 = vector.broadcast %48 : vector<8x1xf32> to vector<8x8xf32>
    %50 = arith.subf %46, %49 : vector<8x8xf32>
    %51 = math.exp %50 : vector<8x8xf32>
    %cst_22 = arith.constant dense<0.000000e+00> : vector<8xf32>
    %52 = vector.multi_reduction <add>, %51, %cst_22 [1] : vector<8x8xf32> to vector<8xf32>
    %53 = vector.shape_cast %52 : vector<8xf32> to vector<8x1xf32>
    %54 = tpu.reciprocal %53 {approx = true} : vector<8x1xf32> -> vector<8x1xf32>
    %55 = vector.broadcast %54 : vector<8x1xf32> to vector<8x8xf32>
    %56 = arith.mulf %51, %55 : vector<8x8xf32>
    %57 = arith.truncf %56 : vector<8x8xf32> to vector<8x8xbf16>
    %58 = arith.truncf %39 : vector<8x8xf32> to vector<8x8xbf16>
    %cst_23 = arith.constant dense<0.000000e+00> : vector<8x8xf32>
    %59 = tpu.matmul %57, %58, %cst_23 {dimension_numbers = #tpu.dot_dimension_numbers<[1], [0], [0], [1], [0, 0, 1, 1], [], []>} : vector<8x8xbf16>, vector<8x8xbf16>, vector<8x8xf32> -> vector<8x8xf32>
    %60 = vector.extract_strided_slice %32 {offsets = [0, 8], sizes = [8, 8], strides = [1, 1]} : vector<16x16xf32> to vector<8x8xf32>
    %61 = vector.extract_strided_slice %33 {offsets = [0, 8], sizes = [8, 8], strides = [1, 1]} : vector<16x16xf32> to vector<8x8xf32>
    %62 = vector.extract_strided_slice %34 {offsets = [0, 8], sizes = [8, 8], strides = [1, 1]} : vector<16x16xf32> to vector<8x8xf32>
    %63 = arith.truncf %60 : vector<8x8xf32> to vector<8x8xbf16>
    %64 = arith.truncf %61 : vector<8x8xf32> to vector<8x8xbf16>
    %cst_24 = arith.constant dense<0.000000e+00> : vector<8x8xf32>
    %65 = tpu.matmul %63, %64, %cst_24 {dimension_numbers = #tpu.dot_dimension_numbers<[1], [1], [0], [0], [0, 0, 1, 0], [], []>} : vector<8x8xbf16>, vector<8x8xbf16>, vector<8x8xf32> -> vector<8x8xf32>
    %cst_25 = arith.constant 0.353553385 : f32
    %66 = vector.broadcast %cst_25 : f32 to vector<8x8xf32>
    %67 = arith.mulf %65, %66 : vector<8x8xf32>
    %68 = vector.broadcast %36 : vector<1x8xf32> to vector<8x8xf32>
    %69 = arith.addf %67, %68 : vector<8x8xf32>
    %cst_26 = arith.constant dense<0xFF800000> : vector<8xf32>
    %70 = vector.multi_reduction <maximumf>, %69, %cst_26 [1] : vector<8x8xf32> to vector<8xf32>
    %71 = vector.shape_cast %70 : vector<8xf32> to vector<8x1xf32>
    %72 = vector.broadcast %71 : vector<8x1xf32> to vector<8x8xf32>
    %73 = arith.subf %69, %72 : vector<8x8xf32>
    %74 = math.exp %73 : vector<8x8xf32>
    %cst_27 = arith.constant dense<0.000000e+00> : vector<8xf32>
    %75 = vector.multi_reduction <add>, %74, %cst_27 [1] : vector<8x8xf32> to vector<8xf32>
    %76 = vector.shape_cast %75 : vector<8xf32> to vector<8x1xf32>
    %77 = tpu.reciprocal %76 {approx = true} : vector<8x1xf32> -> vector<8x1xf32>
    %78 = vector.broadcast %77 : vector<8x1xf32> to vector<8x8xf32>
    %79 = arith.mulf %74, %78 : vector<8x8xf32>
    %80 = arith.truncf %79 : vector<8x8xf32> to vector<8x8xbf16>
    %81 = arith.truncf %62 : vector<8x8xf32> to vector<8x8xbf16>
    %cst_28 = arith.constant dense<0.000000e+00> : vector<8x8xf32>
    %82 = tpu.matmul %80, %81, %cst_28 {dimension_numbers = #tpu.dot_dimension_numbers<[1], [0], [0], [1], [0, 0, 1, 1], [], []>} : vector<8x8xbf16>, vector<8x8xbf16>, vector<8x8xf32> -> vector<8x8xf32>
    %83 = tpu.concatenate %59, %82 in 1 : vector<8x8xf32>, vector<8x8xf32> -> vector<8x16xf32>
    %c1 = arith.constant 1 : index
    %c0_29 = arith.constant 0 : index
    %c0_30 = arith.constant 0 : index
    %84 = vector.load %arg3[%c1, %c0_29, %c0_30] : memref<2x1x8xf32, #tpu.memory_space<vmem>>, vector<1x1x8xf32>
    %85 = vector.shape_cast %84 : vector<1x1x8xf32> to vector<1x8xf32>
    %86 = vector.extract_strided_slice %32 {offsets = [8, 0], sizes = [8, 8], strides = [1, 1]} : vector<16x16xf32> to vector<8x8xf32>
    %87 = vector.extract_strided_slice %33 {offsets = [8, 0], sizes = [8, 8], strides = [1, 1]} : vector<16x16xf32> to vector<8x8xf32>
    %88 = vector.extract_strided_slice %34 {offsets = [8, 0], sizes = [8, 8], strides = [1, 1]} : vector<16x16xf32> to vector<8x8xf32>
    %89 = arith.truncf %86 : vector<8x8xf32> to vector<8x8xbf16>
    %90 = arith.truncf %87 : vector<8x8xf32> to vector<8x8xbf16>
    %cst_31 = arith.constant dense<0.000000e+00> : vector<8x8xf32>
    %91 = tpu.matmul %89, %90, %cst_31 {dimension_numbers = #tpu.dot_dimension_numbers<[1], [1], [0], [0], [0, 0, 1, 0], [], []>} : vector<8x8xbf16>, vector<8x8xbf16>, vector<8x8xf32> -> vector<8x8xf32>
    %cst_32 = arith.constant 0.353553385 : f32
    %92 = vector.broadcast %cst_32 : f32 to vector<8x8xf32>
    %93 = arith.mulf %91, %92 : vector<8x8xf32>
    %94 = vector.broadcast %85 : vector<1x8xf32> to vector<8x8xf32>
    %95 = arith.addf %93, %94 : vector<8x8xf32>
    %cst_33 = arith.constant dense<0xFF800000> : vector<8xf32>
    %96 = vector.multi_reduction <maximumf>, %95, %cst_33 [1] : vector<8x8xf32> to vector<8xf32>
    %97 = vector.shape_cast %96 : vector<8xf32> to vector<8x1xf32>
    %98 = vector.broadcast %97 : vector<8x1xf32> to vector<8x8xf32>
    %99 = arith.subf %95, %98 : vector<8x8xf32>
    %100 = math.exp %99 : vector<8x8xf32>
    %cst_34 = arith.constant dense<0.000000e+00> : vector<8xf32>
    %101 = vector.multi_reduction <add>, %100, %cst_34 [1] : vector<8x8xf32> to vector<8xf32>
    %102 = vector.shape_cast %101 : vector<8xf32> to vector<8x1xf32>
    %103 = tpu.reciprocal %102 {approx = true} : vector<8x1xf32> -> vector<8x1xf32>
    %104 = vector.broadcast %103 : vector<8x1xf32> to vector<8x8xf32>
    %105 = arith.mulf %100, %104 : vector<8x8xf32>
    %106 = arith.truncf %105 : vector<8x8xf32> to vector<8x8xbf16>
    %107 = arith.truncf %88 : vector<8x8xf32> to vector<8x8xbf16>
    %cst_35 = arith.constant dense<0.000000e+00> : vector<8x8xf32>
    %108 = tpu.matmul %106, %107, %cst_35 {dimension_numbers = #tpu.dot_dimension_numbers<[1], [0], [0], [1], [0, 0, 1, 1], [], []>} : vector<8x8xbf16>, vector<8x8xbf16>, vector<8x8xf32> -> vector<8x8xf32>
    %109 = vector.extract_strided_slice %32 {offsets = [8, 8], sizes = [8, 8], strides = [1, 1]} : vector<16x16xf32> to vector<8x8xf32>
    %110 = vector.extract_strided_slice %33 {offsets = [8, 8], sizes = [8, 8], strides = [1, 1]} : vector<16x16xf32> to vector<8x8xf32>
    %111 = vector.extract_strided_slice %34 {offsets = [8, 8], sizes = [8, 8], strides = [1, 1]} : vector<16x16xf32> to vector<8x8xf32>
    %112 = arith.truncf %109 : vector<8x8xf32> to vector<8x8xbf16>
    %113 = arith.truncf %110 : vector<8x8xf32> to vector<8x8xbf16>
    %cst_36 = arith.constant dense<0.000000e+00> : vector<8x8xf32>
    %114 = tpu.matmul %112, %113, %cst_36 {dimension_numbers = #tpu.dot_dimension_numbers<[1], [1], [0], [0], [0, 0, 1, 0], [], []>} : vector<8x8xbf16>, vector<8x8xbf16>, vector<8x8xf32> -> vector<8x8xf32>
    %cst_37 = arith.constant 0.353553385 : f32
    %115 = vector.broadcast %cst_37 : f32 to vector<8x8xf32>
    %116 = arith.mulf %114, %115 : vector<8x8xf32>
    %117 = vector.broadcast %85 : vector<1x8xf32> to vector<8x8xf32>
    %118 = arith.addf %116, %117 : vector<8x8xf32>
    %cst_38 = arith.constant dense<0xFF800000> : vector<8xf32>
    %119 = vector.multi_reduction <maximumf>, %118, %cst_38 [1] : vector<8x8xf32> to vector<8xf32>
    %120 = vector.shape_cast %119 : vector<8xf32> to vector<8x1xf32>
    %121 = vector.broadcast %120 : vector<8x1xf32> to vector<8x8xf32>
    %122 = arith.subf %118, %121 : vector<8x8xf32>
    %123 = math.exp %122 : vector<8x8xf32>
    %cst_39 = arith.constant dense<0.000000e+00> : vector<8xf32>
    %124 = vector.multi_reduction <add>, %123, %cst_39 [1] : vector<8x8xf32> to vector<8xf32>
    %125 = vector.shape_cast %124 : vector<8xf32> to vector<8x1xf32>
    %126 = tpu.reciprocal %125 {approx = true} : vector<8x1xf32> -> vector<8x1xf32>
    %127 = vector.broadcast %126 : vector<8x1xf32> to vector<8x8xf32>
    %128 = arith.mulf %123, %127 : vector<8x8xf32>
    %129 = arith.truncf %128 : vector<8x8xf32> to vector<8x8xbf16>
    %130 = arith.truncf %111 : vector<8x8xf32> to vector<8x8xbf16>
    %cst_40 = arith.constant dense<0.000000e+00> : vector<8x8xf32>
    %131 = tpu.matmul %129, %130, %cst_40 {dimension_numbers = #tpu.dot_dimension_numbers<[1], [0], [0], [1], [0, 0, 1, 1], [], []>} : vector<8x8xbf16>, vector<8x8xbf16>, vector<8x8xf32> -> vector<8x8xf32>
    %132 = tpu.concatenate %108, %131 in 1 : vector<8x8xf32>, vector<8x8xf32> -> vector<8x16xf32>
    %133 = tpu.concatenate %83, %132 in 0 : vector<8x16xf32>, vector<8x16xf32> -> vector<16x16xf32>
    %134 = arith.truncf %133 : vector<16x16xf32> to vector<16x16xbf16>
    %c0_41 = arith.constant 0 : index
    %c0_42 = arith.constant 0 : index
    %c0_43 = arith.constant 0 : index
    %135 = vector.load %arg7[%c0_41, %c0_42, %c0_43] : memref<1x16x32xbf16, #tpu.memory_space<vmem>>, vector<1x16x32xbf16>
    %136 = vector.shape_cast %135 : vector<1x16x32xbf16> to vector<16x32xbf16>
    %cst_44 = arith.constant dense<0.000000e+00> : vector<16x32xf32>
    %137 = tpu.matmul %134, %136, %cst_44 {dimension_numbers = #tpu.dot_dimension_numbers<[1], [0], [0], [1], [0, 0, 1, 1], [], []>} : vector<16x16xbf16>, vector<16x32xbf16>, vector<16x32xf32> -> vector<16x32xf32>
    %138 = arith.addf %3, %137 : vector<16x32xf32>
    %c0_45 = arith.constant 0 : index
    %c0_46 = arith.constant 0 : index
    %c0_47 = arith.constant 0 : index
    %139 = vector.load %arg8[%c0_45, %c0_46, %c0_47] : memref<1x1x32xf32, #tpu.memory_space<vmem>>, vector<1x1x32xf32>
    %140 = vector.shape_cast %139 : vector<1x1x32xf32> to vector<1x32xf32>
    %141 = vector.broadcast %140 : vector<1x32xf32> to vector<16x32xf32>
    %142 = arith.addf %138, %141 : vector<16x32xf32>
    %c0_48 = arith.constant 0 : index
    %c0_49 = arith.constant 0 : index
    %c0_50 = arith.constant 0 : index
    %143 = vector.load %arg9[%c0_48, %c0_49, %c0_50] : memref<1x1x32xf32, #tpu.memory_space<vmem>>, vector<1x1x32xf32>
    %144 = vector.shape_cast %143 : vector<1x1x32xf32> to vector<1x32xf32>
    %c0_51 = arith.constant 0 : index
    %c0_52 = arith.constant 0 : index
    %c0_53 = arith.constant 0 : index
    %145 = vector.load %arg10[%c0_51, %c0_52, %c0_53] : memref<1x1x32xf32, #tpu.memory_space<vmem>>, vector<1x1x32xf32>
    %146 = vector.shape_cast %145 : vector<1x1x32xf32> to vector<1x32xf32>
    %cst_54 = arith.constant dense<0.000000e+00> : vector<16xf32>
    %147 = vector.multi_reduction <add>, %142, %cst_54 [1] : vector<16x32xf32> to vector<16xf32>
    %148 = vector.shape_cast %147 : vector<16xf32> to vector<16x1xf32>
    %cst_55 = arith.constant 3.200000e+01 : f32
    %149 = vector.broadcast %cst_55 : f32 to vector<16x1xf32>
    %150 = arith.divf %148, %149 : vector<16x1xf32>
    %151 = vector.broadcast %150 : vector<16x1xf32> to vector<16x32xf32>
    %152 = arith.subf %142, %151 : vector<16x32xf32>
    %153 = arith.mulf %152, %152 : vector<16x32xf32>
    %cst_56 = arith.constant dense<0.000000e+00> : vector<16xf32>
    %154 = vector.multi_reduction <add>, %153, %cst_56 [1] : vector<16x32xf32> to vector<16xf32>
    %155 = vector.shape_cast %154 : vector<16xf32> to vector<16x1xf32>
    %cst_57 = arith.constant 3.200000e+01 : f32
    %156 = vector.broadcast %cst_57 : f32 to vector<16x1xf32>
    %157 = arith.divf %155, %156 : vector<16x1xf32>
    %cst_58 = arith.constant 9.99999974E-6 : f32
    %158 = vector.broadcast %cst_58 : f32 to vector<16x1xf32>
    %159 = arith.addf %157, %158 : vector<16x1xf32>
    %160 = math.rsqrt %159 : vector<16x1xf32>
    %161 = vector.broadcast %160 : vector<16x1xf32> to vector<16x32xf32>
    %162 = arith.mulf %152, %161 : vector<16x32xf32>
    %163 = vector.broadcast %144 : vector<1x32xf32> to vector<16x32xf32>
    %164 = arith.mulf %162, %163 : vector<16x32xf32>
    %165 = vector.broadcast %146 : vector<1x32xf32> to vector<16x32xf32>
    %166 = arith.addf %164, %165 : vector<16x32xf32>
    %167 = arith.truncf %166 : vector<16x32xf32> to vector<16x32xbf16>
    %c0_59 = arith.constant 0 : index
    %c0_60 = arith.constant 0 : index
    %c0_61 = arith.constant 0 : index
    %168 = vector.load %arg11[%c0_59, %c0_60, %c0_61] : memref<1x32x128xbf16, #tpu.memory_space<vmem>>, vector<1x32x128xbf16>
    %169 = vector.shape_cast %168 : vector<1x32x128xbf16> to vector<32x128xbf16>
    %cst_62 = arith.constant dense<0.000000e+00> : vector<16x128xf32>
    %170 = tpu.matmul %167, %169, %cst_62 {dimension_numbers = #tpu.dot_dimension_numbers<[1], [0], [0], [1], [0, 0, 1, 1], [], []>} : vector<16x32xbf16>, vector<32x128xbf16>, vector<16x128xf32> -> vector<16x128xf32>
    %c0_63 = arith.constant 0 : index
    %c0_64 = arith.constant 0 : index
    %c0_65 = arith.constant 0 : index
    %171 = vector.load %arg12[%c0_63, %c0_64, %c0_65] : memref<1x1x128xf32, #tpu.memory_space<vmem>>, vector<1x1x128xf32>
    %172 = vector.shape_cast %171 : vector<1x1x128xf32> to vector<1x128xf32>
    %173 = vector.broadcast %172 : vector<1x128xf32> to vector<16x128xf32>
    %174 = arith.addf %170, %173 : vector<16x128xf32>
    %175 = arith.mulf %174, %174 : vector<16x128xf32>
    %176 = arith.mulf %174, %175 : vector<16x128xf32>
    %cst_66 = arith.constant 4.471500e-02 : f32
    %177 = vector.broadcast %cst_66 : f32 to vector<16x128xf32>
    %178 = arith.mulf %177, %176 : vector<16x128xf32>
    %179 = arith.addf %174, %178 : vector<16x128xf32>
    %cst_67 = arith.constant 0.797884583 : f32
    %180 = vector.broadcast %cst_67 : f32 to vector<16x128xf32>
    %181 = arith.mulf %180, %179 : vector<16x128xf32>
    %182 = math.tanh %181 : vector<16x128xf32>
    %cst_68 = arith.constant 1.000000e+00 : f32
    %183 = vector.broadcast %cst_68 : f32 to vector<16x128xf32>
    %184 = arith.addf %183, %182 : vector<16x128xf32>
    %cst_69 = arith.constant 5.000000e-01 : f32
    %185 = vector.broadcast %cst_69 : f32 to vector<16x128xf32>
    %186 = arith.mulf %185, %184 : vector<16x128xf32>
    %187 = arith.mulf %174, %186 : vector<16x128xf32>
    %188 = arith.truncf %187 : vector<16x128xf32> to vector<16x128xbf16>
    %c0_70 = arith.constant 0 : index
    %c0_71 = arith.constant 0 : index
    %c0_72 = arith.constant 0 : index
    %189 = vector.load %arg13[%c0_70, %c0_71, %c0_72] : memref<1x128x32xbf16, #tpu.memory_space<vmem>>, vector<1x128x32xbf16>
    %190 = vector.shape_cast %189 : vector<1x128x32xbf16> to vector<128x32xbf16>
    %cst_73 = arith.constant dense<0.000000e+00> : vector<16x32xf32>
    %191 = tpu.matmul %188, %190, %cst_73 {dimension_numbers = #tpu.dot_dimension_numbers<[1], [0], [0], [1], [0, 0, 1, 1], [], []>} : vector<16x128xbf16>, vector<128x32xbf16>, vector<16x32xf32> -> vector<16x32xf32>
    %192 = arith.addf %142, %191 : vector<16x32xf32>
    %c0_74 = arith.constant 0 : index
    %c0_75 = arith.constant 0 : index
    %c0_76 = arith.constant 0 : index
    %193 = vector.load %arg14[%c0_74, %c0_75, %c0_76] : memref<1x1x32xf32, #tpu.memory_space<vmem>>, vector<1x1x32xf32>
    %194 = vector.shape_cast %193 : vector<1x1x32xf32> to vector<1x32xf32>
    %195 = vector.broadcast %194 : vector<1x32xf32> to vector<16x32xf32>
    %196 = arith.addf %192, %195 : vector<16x32xf32>
    %c1_i32 = arith.constant 1 : i32
    %197 = arith.cmpi slt, %arg1, %c1_i32 : i32
    %198 = arith.extui %197 : i1 to i32
    %c0_i32_77 = arith.constant 0 : i32
    %199 = arith.cmpi ne, %198, %c0_i32_77 : i32
    scf.if %199 {
      %c0_80 = arith.constant 0 : index
      %c0_81 = arith.constant 0 : index
      %203 = vector.load %arg17[%c0_80, %c0_81] : memref<16x32xf32, #tpu.memory_space<vmem>>, vector<16x32xf32>
      tpu.vector_store %arg17[%c0_80, %c0_81], %196 {strides = array<i32>} : memref<16x32xf32, #tpu.memory_space<vmem>>, vector<16x32xf32>,
    } else {
    }
    %c1_i32_78 = arith.constant 1 : i32
    %200 = arith.cmpi eq, %arg1, %c1_i32_78 : i32
    %201 = arith.extui %200 : i1 to i32
    %c0_i32_79 = arith.constant 0 : i32
    %202 = arith.cmpi ne, %201, %c0_i32_79 : i32
    scf.if %202 {
      %c0_80 = arith.constant 0 : index
      %c0_81 = arith.constant 0 : index
      %203 = vector.load %arg15[%c0_80, %c0_81] : memref<1x32xf32, #tpu.memory_space<vmem>>, vector<1x32xf32>
      %c0_82 = arith.constant 0 : index
      %c0_83 = arith.constant 0 : index
      %204 = vector.load %arg16[%c0_82, %c0_83] : memref<1x32xf32, #tpu.memory_space<vmem>>, vector<1x32xf32>
      %cst_84 = arith.constant dense<0.000000e+00> : vector<16xf32>
      %205 = vector.multi_reduction <add>, %196, %cst_84 [1] : vector<16x32xf32> to vector<16xf32>
      %206 = vector.shape_cast %205 : vector<16xf32> to vector<16x1xf32>
      %cst_85 = arith.constant 3.200000e+01 : f32
      %207 = vector.broadcast %cst_85 : f32 to vector<16x1xf32>
      %208 = arith.divf %206, %207 : vector<16x1xf32>
      %209 = vector.broadcast %208 : vector<16x1xf32> to vector<16x32xf32>
      %210 = arith.subf %196, %209 : vector<16x32xf32>
      %211 = arith.mulf %210, %210 : vector<16x32xf32>
      %cst_86 = arith.constant dense<0.000000e+00> : vector<16xf32>
      %212 = vector.multi_reduction <add>, %211, %cst_86 [1] : vector<16x32xf32> to vector<16xf32>
      %213 = vector.shape_cast %212 : vector<16xf32> to vector<16x1xf32>
      %cst_87 = arith.constant 3.200000e+01 : f32
      %214 = vector.broadcast %cst_87 : f32 to vector<16x1xf32>
      %215 = arith.divf %213, %214 : vector<16x1xf32>
      %cst_88 = arith.constant 9.99999974E-6 : f32
      %216 = vector.broadcast %cst_88 : f32 to vector<16x1xf32>
      %217 = arith.addf %215, %216 : vector<16x1xf32>
      %218 = math.rsqrt %217 : vector<16x1xf32>
      %219 = vector.broadcast %218 : vector<16x1xf32> to vector<16x32xf32>
      %220 = arith.mulf %210, %219 : vector<16x32xf32>
      %221 = vector.broadcast %203 : vector<1x32xf32> to vector<16x32xf32>
      %222 = arith.mulf %220, %221 : vector<16x32xf32>
      %223 = vector.broadcast %204 : vector<1x32xf32> to vector<16x32xf32>
      %224 = arith.addf %222, %223 : vector<16x32xf32>
      %c0_89 = arith.constant 0 : index
      %c0_90 = arith.constant 0 : index
      %225 = vector.load %arg17[%c0_89, %c0_90] : memref<16x32xf32, #tpu.memory_space<vmem>>, vector<16x32xf32>
      tpu.vector_store %arg17[%c0_89, %c0_90], %224 {strides = array<i32>} : memref<16x32xf32, #tpu.memory_space<vmem>>, vector<16x32xf32>,
    } else {
    }
    return
  }
  func.func @transform_0(%arg0: i32, %arg1: i32) -> (i32, i32) {
    %c0_i32 = arith.constant 0 : i32
    %c0_i32_0 = arith.constant 0 : i32
    return %arg0, %c0_i32 : i32, i32
  }
  func.func @transform_1(%arg0: i32, %arg1: i32) -> (i32, i32, i32) {
    %c0_i32 = arith.constant 0 : i32
    %c0_i32_0 = arith.constant 0 : i32
    %c0_i32_1 = arith.constant 0 : i32
    return %arg0, %c0_i32, %c0_i32_0 : i32, i32, i32
  }
  func.func @transform_2(%arg0: i32, %arg1: i32) -> (i32, i32, i32) {
    %c0_i32 = arith.constant 0 : i32
    %c0_i32_0 = arith.constant 0 : i32
    %c0_i32_1 = arith.constant 0 : i32
    return %arg1, %c0_i32, %c0_i32_0 : i32, i32, i32
  }
  func.func @transform_3(%arg0: i32, %arg1: i32) -> (i32, i32, i32) {
    %c0_i32 = arith.constant 0 : i32
    %c0_i32_0 = arith.constant 0 : i32
    %c0_i32_1 = arith.constant 0 : i32
    return %arg1, %c0_i32, %c0_i32_0 : i32, i32, i32
  }
  func.func @transform_4(%arg0: i32, %arg1: i32) -> (i32, i32, i32) {
    %c0_i32 = arith.constant 0 : i32
    %c0_i32_0 = arith.constant 0 : i32
    %c0_i32_1 = arith.constant 0 : i32
    return %arg1, %c0_i32, %c0_i32_0 : i32, i32, i32
  }
  func.func @transform_5(%arg0: i32, %arg1: i32) -> (i32, i32, i32) {
    %c0_i32 = arith.constant 0 : i32
    %c0_i32_0 = arith.constant 0 : i32
    %c0_i32_1 = arith.constant 0 : i32
    return %arg1, %c0_i32, %c0_i32_0 : i32, i32, i32
  }
  func.func @transform_6(%arg0: i32, %arg1: i32) -> (i32, i32, i32) {
    %c0_i32 = arith.constant 0 : i32
    %c0_i32_0 = arith.constant 0 : i32
    %c0_i32_1 = arith.constant 0 : i32
    return %arg1, %c0_i32, %c0_i32_0 : i32, i32, i32
  }
  func.func @transform_7(%arg0: i32, %arg1: i32) -> (i32, i32, i32) {
    %c0_i32 = arith.constant 0 : i32
    %c0_i32_0 = arith.constant 0 : i32
    %c0_i32_1 = arith.constant 0 : i32
    return %arg1, %c0_i32, %c0_i32_0 : i32, i32, i32
  }
  func.func @transform_8(%arg0: i32, %arg1: i32) -> (i32, i32, i32) {
    %c0_i32 = arith.constant 0 : i32
    %c0_i32_0 = arith.constant 0 : i32
    %c0_i32_1 = arith.constant 0 : i32
    return %arg1, %c0_i32, %c0_i32_0 : i32, i32, i32
  }
  func.func @transform_9(%arg0: i32, %arg1: i32) -> (i32, i32, i32) {
    %c0_i32 = arith.constant 0 : i32
    %c0_i32_0 = arith.constant 0 : i32
    %c0_i32_1 = arith.constant 0 : i32
    return %arg1, %c0_i32, %c0_i32_0 : i32, i32, i32
  }
  func.func @transform_10(%arg0: i32, %arg1: i32) -> (i32, i32, i32) {
    %c0_i32 = arith.constant 0 : i32
    %c0_i32_0 = arith.constant 0 : i32
    %c0_i32_1 = arith.constant 0 : i32
    return %arg1, %c0_i32, %c0_i32_0 : i32, i32, i32
  }
  func.func @transform_11(%arg0: i32, %arg1: i32) -> (i32, i32, i32) {
    %c0_i32 = arith.constant 0 : i32
    %c0_i32_0 = arith.constant 0 : i32
    %c0_i32_1 = arith.constant 0 : i32
    return %arg1, %c0_i32, %c0_i32_0 : i32, i32, i32
  }
  func.func @transform_12(%arg0: i32, %arg1: i32) -> (i32, i32, i32) {
    %c0_i32 = arith.constant 0 : i32
    %c0_i32_0 = arith.constant 0 : i32
    %c0_i32_1 = arith.constant 0 : i32
    return %arg1, %c0_i32, %c0_i32_0 : i32, i32, i32
  }
  func.func @transform_13(%arg0: i32, %arg1: i32) -> (i32, i32) {
    %c0_i32 = arith.constant 0 : i32
    %c0_i32_0 = arith.constant 0 : i32
    %c0_i32_1 = arith.constant 0 : i32
    return %c0_i32, %c0_i32_0 : i32, i32
  }
  func.func @transform_14(%arg0: i32, %arg1: i32) -> (i32, i32) {
    %c0_i32 = arith.constant 0 : i32
    %c0_i32_0 = arith.constant 0 : i32
    %c0_i32_1 = arith.constant 0 : i32
    return %c0_i32, %c0_i32_0 : i32, i32
  }
  func.func @transform_15(%arg0: i32, %arg1: i32) -> (i32, i32) {
    %c0_i32 = arith.constant 0 : i32
    %c0_i32_0 = arith.constant 0 : i32
    return %arg0, %c0_i32 : i32, i32
  }
}

</mosaic_0001>

<llo_original>
// kernel: tpu_custom_call.1
$region0: #{tpu_custom_call.1}
  #allocation0 [shape = 'u32[]', space=smem, size = 0x4, offset = 0x4, fixed_abs, tag = 'smem constant byte address 0x4 - core index']
  #allocation1 [shape = 'u32[72,128]{1,0:T(1,128)}', space=vmem, size = 0x9000, scoped, tag = 'internal scratch']
  %s0 = inlined_call_operand.vmem [shape: f32[32,32], index: 0, kind: input, shape index: {}]
  %s1 = inlined_call_operand.vmem [shape: f32[4,1,8], index: 1, kind: input, shape index: {}]
  %s2 = inlined_call_operand.vmem [shape: f32[2,1,32], index: 2, kind: input, shape index: {}]
  %s3 = inlined_call_operand.vmem [shape: f32[2,1,32], index: 3, kind: input, shape index: {}]
  %s4 = inlined_call_operand.vmem [shape: bf16[2,32,48], index: 4, kind: input, shape index: {}]
  %s5 = inlined_call_operand.vmem [shape: bf16[2,16,32], index: 5, kind: input, shape index: {}]
  %s6 = inlined_call_operand.vmem [shape: f32[2,1,32], index: 6, kind: input, shape index: {}]
  %s7 = inlined_call_operand.vmem [shape: f32[2,1,32], index: 7, kind: input, shape index: {}]
  %s8 = inlined_call_operand.vmem [shape: f32[2,1,32], index: 8, kind: input, shape index: {}]
  %s9 = inlined_call_operand.vmem [shape: bf16[2,32,128], index: 9, kind: input, shape index: {}]
  %s10 = inlined_call_operand.vmem [shape: f32[2,1,128], index: 10, kind: input, shape index: {}]
  %s11 = inlined_call_operand.vmem [shape: bf16[2,128,32], index: 11, kind: input, shape index: {}]
  %s12 = inlined_call_operand.vmem [shape: f32[2,1,32], index: 12, kind: input, shape index: {}]
  %s13 = inlined_call_operand.vmem [shape: f32[1,32], index: 13, kind: input, shape index: {}]
  %s14 = inlined_call_operand.vmem [shape: f32[1,32], index: 14, kind: input, shape index: {}]
  %s15 = inlined_call_operand.hbm [shape: f32[32,32], index: 15, kind: output, shape index: {}]
  %s16 = sld [smem:[#allocation0]]
  $region105: #{tpu_custom_call.1} parent=0
    _
  %s18 = ssub.s32 1, %s16
  %s19 = scalar_select 0, %s18, %s16
  $region1: #{tpu_custom_call.1} parent=0
    #allocation2 [shape = 'u8[16384]{0}', space=vmem, size = 0x4000, scoped, tag = 'output window, operand 0']
    #allocation3 [shape = 's32[2]{0}', space=sflag, size = 0x8, scoped, tag = 'scoped memory for tpu_custom_call.1']
    %20 = vsyncpa [#allocation3], 0
    %s21 = scalar_lea.sflag [#allocation3], 1
    %22 = vsyncpa %s21, 0
    loop: start=0, step=1, limit=6
    $region2: #{tpu_custom_call.1} parent=1 // loop_pre_header
      _
    $region3: #{tpu_custom_call.1} parent=1 // loop_header
      %s24 = sphi 0, %s28
      %p25 = scmp.ge.s32.totalorder %s24, 6
      %s31 = sphi 0, %s43
      %s32 = sphi 0, %s39
      %s33 = sphi 0, %s31
      %s34 = sphi 0, %s32
      %s35 = sphi 0, %s33
      %s36 = sphi 0, %s34
      %s46 = sphi 0, %s48
      %s49 = sphi 0, %s46
      %s50 = sphi 0, %s49
      %s66 = sphi 0, %s50
      %s72 = sphi 0, %s74
      %s75 = sphi 0, %s72
      %s76 = sphi 0, %s75
      %s92 = sphi 0, %s76
      %s98 = sphi 0, %s100
      %s101 = sphi 0, %s98
      %s102 = sphi 0, %s101
      %s118 = sphi 0, %s102
      %s124 = sphi 0, %s126
      %s127 = sphi 0, %s124
      %s128 = sphi 0, %s127
      %s144 = sphi 0, %s128
      %s150 = sphi 0, %s152
      %s153 = sphi 0, %s150
      %s154 = sphi 0, %s153
      %s170 = sphi 0, %s154
      %s176 = sphi 0, %s178
      %s179 = sphi 0, %s176
      %s180 = sphi 0, %s179
      %s196 = sphi 0, %s180
      %s202 = sphi 0, %s204
      %s205 = sphi 0, %s202
      %s206 = sphi 0, %s205
      %s222 = sphi 0, %s206
      %s228 = sphi 0, %s230
      %s231 = sphi 0, %s228
      %s232 = sphi 0, %s231
      %s248 = sphi 0, %s232
      %s254 = sphi 0, %s256
      %s257 = sphi 0, %s254
      %s258 = sphi 0, %s257
      %s274 = sphi 0, %s258
      %s280 = sphi 0, %s282
      %s283 = sphi 0, %s280
      %s284 = sphi 0, %s283
      %s300 = sphi 0, %s284
      %s306 = sphi 0, %s308
      %s309 = sphi 0, %s306
      %s310 = sphi 0, %s309
      %s326 = sphi 0, %s310
      %s332 = sphi 0, %s334
      %s335 = sphi 0, %s332
      %s336 = sphi 0, %s335
      %s352 = sphi 0, %s336
      %s358 = sphi 0, %s360
      %s361 = sphi 0, %s358
      %s362 = sphi 0, %s361
      %s378 = sphi 0, %s362
      %s382 = sphi 0, %s382
      %s384 = sphi 0, %s382
      %s385 = sphi 0, %s384
      %s399 = sphi 0, %s385
      %s403 = sphi 0, %s403
      %s405 = sphi 0, %s403
      %s406 = sphi 0, %s405
      %s420 = sphi 0, %s406
      %s426 = sphi 0, %s428
      %s429 = sphi 0, %s426
      %s430 = sphi 0, %s429
      %s446 = sphi 0, %s430
    $region4: #{tpu_custom_call.1} parent=1 // loop_header_branch
      %27 = sbr.rel (%p25) target = $region8
    $region5: #{tpu_custom_call.1} parent=1 // loop_body
      %s29 = ssub.s32 %s24, 1
      %s30 = ssub.s32 %s24, 2
      %s37 = sadd.s32 1, %s32
      %p38 = scmp.ge.s32.totalorder %s37, 2
      %s39 = scalar_select %p38, 0, %s37
      %s40 = sadd.s32 1, %s31
      %s41 = scalar_select %p38, %s40, %s31
      %p42 = scmp.ge.s32.totalorder %s41, 2
      %s43 = scalar_select %p42, 0, %s41
      %s44 = ssub.s32 %s31, %s43
      %p45 = scmp.eq.s32.totalorder %s44, 0
      %s47 = sadd.s32 %s46, 1
      %s48 = scalar_select %p45, %s46, %s47
      %p51 = pneg %p45
      %p52 = scmp.eq.s32.totalorder %s24, 3
      %p53 = por %p51, %p52
      %p54 = scmp.ne.s32.totalorder %s46, %s49
      %p55 = scmp.eq.s32.totalorder %s24, 0
      %p56 = por %p54, %p55
      %p57 = scmp.ne.s32.totalorder %s46, %s49
      %p58 = scmp.eq.s32.totalorder %s29, 3
      %p59 = por %p57, %p58
      %p60 = scmp.ne.s32.totalorder %s49, %s50
      %p61 = scmp.eq.s32.totalorder %s29, 0
      %p62 = por %p60, %p61
      %p63 = scmp.ne.s32.totalorder %s49, %s50
      %p64 = scmp.eq.s32.totalorder %s30, 3
      %p65 = por %p63, %p64
      %p67 = scmp.ne.s32.totalorder %s50, %s66
      %p68 = scmp.eq.s32.totalorder %s30, 0
      %p69 = por %p67, %p68
      %s70 = ssub.s32 %s31, %s43
      %p71 = scmp.eq.s32.totalorder %s70, 0
      %s73 = sadd.s32 %s72, 1
      %s74 = scalar_select %p71, %s72, %s73
      %p77 = pneg %p71
      %p78 = scmp.eq.s32.totalorder %s24, 3
      %p79 = por %p77, %p78
      %p80 = scmp.ne.s32.totalorder %s72, %s75
      %p81 = scmp.eq.s32.totalorder %s24, 0
      %p82 = por %p80, %p81
      %p83 = scmp.ne.s32.totalorder %s72, %s75
      %p84 = scmp.eq.s32.totalorder %s29, 3
      %p85 = por %p83, %p84
      %p86 = scmp.ne.s32.totalorder %s75, %s76
      %p87 = scmp.eq.s32.totalorder %s29, 0
      %p88 = por %p86, %p87
      %p89 = scmp.ne.s32.totalorder %s75, %s76
      %p90 = scmp.eq.s32.totalorder %s30, 3
      %p91 = por %p89, %p90
      %p93 = scmp.ne.s32.totalorder %s76, %s92
      %p94 = scmp.eq.s32.totalorder %s30, 0
      %p95 = por %p93, %p94
      %s96 = ssub.s32 %s32, %s39
      %p97 = scmp.eq.s32.totalorder %s96, 0
      %s99 = sadd.s32 %s98, 1
      %s100 = scalar_select %p97, %s98, %s99
      %p103 = pneg %p97
      %p104 = scmp.eq.s32.totalorder %s24, 3
      %p105 = por %p103, %p104
      %p106 = scmp.ne.s32.totalorder %s98, %s101
      %p107 = scmp.eq.s32.totalorder %s24, 0
      %p108 = por %p106, %p107
      %p109 = scmp.ne.s32.totalorder %s98, %s101
      %p110 = scmp.eq.s32.totalorder %s29, 3
      %p111 = por %p109, %p110
      %p112 = scmp.ne.s32.totalorder %s101, %s102
      %p113 = scmp.eq.s32.totalorder %s29, 0
      %p114 = por %p112, %p113
      %p115 = scmp.ne.s32.totalorder %s101, %s102
      %p116 = scmp.eq.s32.totalorder %s30, 3
      %p117 = por %p115, %p116
      %p119 = scmp.ne.s32.totalorder %s102, %s118
      %p120 = scmp.eq.s32.totalorder %s30, 0
      %p121 = por %p119, %p120
      %s122 = ssub.s32 %s32, %s39
      %p123 = scmp.eq.s32.totalorder %s122, 0
      %s125 = sadd.s32 %s124, 1
      %s126 = scalar_select %p123, %s124, %s125
      %p129 = pneg %p123
      %p130 = scmp.eq.s32.totalorder %s24, 3
      %p131 = por %p129, %p130
      %p132 = scmp.ne.s32.totalorder %s124, %s127
      %p133 = scmp.eq.s32.totalorder %s24, 0
      %p134 = por %p132, %p133
      %p135 = scmp.ne.s32.totalorder %s124, %s127
      %p136 = scmp.eq.s32.totalorder %s29, 3
      %p137 = por %p135, %p136
      %p138 = scmp.ne.s32.totalorder %s127, %s128
      %p139 = scmp.eq.s32.totalorder %s29, 0
      %p140 = por %p138, %p139
      %p141 = scmp.ne.s32.totalorder %s127, %s128
      %p142 = scmp.eq.s32.totalorder %s30, 3
      %p143 = por %p141, %p142
      %p145 = scmp.ne.s32.totalorder %s128, %s144
      %p146 = scmp.eq.s32.totalorder %s30, 0
      %p147 = por %p145, %p146
      %s148 = ssub.s32 %s32, %s39
      %p149 = scmp.eq.s32.totalorder %s148, 0
      %s151 = sadd.s32 %s150, 1
      %s152 = scalar_select %p149, %s150, %s151
      %p155 = pneg %p149
      %p156 = scmp.eq.s32.totalorder %s24, 3
      %p157 = por %p155, %p156
      %p158 = scmp.ne.s32.totalorder %s150, %s153
      %p159 = scmp.eq.s32.totalorder %s24, 0
      %p160 = por %p158, %p159
      %p161 = scmp.ne.s32.totalorder %s150, %s153
      %p162 = scmp.eq.s32.totalorder %s29, 3
      %p163 = por %p161, %p162
      %p164 = scmp.ne.s32.totalorder %s153, %s154
      %p165 = scmp.eq.s32.totalorder %s29, 0
      %p166 = por %p164, %p165
      %p167 = scmp.ne.s32.totalorder %s153, %s154
      %p168 = scmp.eq.s32.totalorder %s30, 3
      %p169 = por %p167, %p168
      %p171 = scmp.ne.s32.totalorder %s154, %s170
      %p172 = scmp.eq.s32.totalorder %s30, 0
      %p173 = por %p171, %p172
      %s174 = ssub.s32 %s32, %s39
      %p175 = scmp.eq.s32.totalorder %s174, 0
      %s177 = sadd.s32 %s176, 1
      %s178 = scalar_select %p175, %s176, %s177
      %p181 = pneg %p175
      %p182 = scmp.eq.s32.totalorder %s24, 3
      %p183 = por %p181, %p182
      %p184 = scmp.ne.s32.totalorder %s176, %s179
      %p185 = scmp.eq.s32.totalorder %s24, 0
      %p186 = por %p184, %p185
      %p187 = scmp.ne.s32.totalorder %s176, %s179
      %p188 = scmp.eq.s32.totalorder %s29, 3
      %p189 = por %p187, %p188
      %p190 = scmp.ne.s32.totalorder %s179, %s180
      %p191 = scmp.eq.s32.totalorder %s29, 0
      %p192 = por %p190, %p191
      %p193 = scmp.ne.s32.totalorder %s179, %s180
      %p194 = scmp.eq.s32.totalorder %s30, 3
      %p195 = por %p193, %p194
      %p197 = scmp.ne.s32.totalorder %s180, %s196
      %p198 = scmp.eq.s32.totalorder %s30, 0
      %p199 = por %p197, %p198
      %s200 = ssub.s32 %s32, %s39
      %p201 = scmp.eq.s32.totalorder %s200, 0
      %s203 = sadd.s32 %s202, 1
      %s204 = scalar_select %p201, %s202, %s203
      %p207 = pneg %p201
      %p208 = scmp.eq.s32.totalorder %s24, 3
      %p209 = por %p207, %p208
      %p210 = scmp.ne.s32.totalorder %s202, %s205
      %p211 = scmp.eq.s32.totalorder %s24, 0
      %p212 = por %p210, %p211
      %p213 = scmp.ne.s32.totalorder %s202, %s205
      %p214 = scmp.eq.s32.totalorder %s29, 3
      %p215 = por %p213, %p214
      %p216 = scmp.ne.s32.totalorder %s205, %s206
      %p217 = scmp.eq.s32.totalorder %s29, 0
      %p218 = por %p216, %p217
      %p219 = scmp.ne.s32.totalorder %s205, %s206
      %p220 = scmp.eq.s32.totalorder %s30, 3
      %p221 = por %p219, %p220
      %p223 = scmp.ne.s32.totalorder %s206, %s222
      %p224 = scmp.eq.s32.totalorder %s30, 0
      %p225 = por %p223, %p224
      %s226 = ssub.s32 %s32, %s39
      %p227 = scmp.eq.s32.totalorder %s226, 0
      %s229 = sadd.s32 %s228, 1
      %s230 = scalar_select %p227, %s228, %s229
      %p233 = pneg %p227
      %p234 = scmp.eq.s32.totalorder %s24, 3
      %p235 = por %p233, %p234
      %p236 = scmp.ne.s32.totalorder %s228, %s231
      %p237 = scmp.eq.s32.totalorder %s24, 0
      %p238 = por %p236, %p237
      %p239 = scmp.ne.s32.totalorder %s228, %s231
      %p240 = scmp.eq.s32.totalorder %s29, 3
      %p241 = por %p239, %p240
      %p242 = scmp.ne.s32.totalorder %s231, %s232
      %p243 = scmp.eq.s32.totalorder %s29, 0
      %p244 = por %p242, %p243
      %p245 = scmp.ne.s32.totalorder %s231, %s232
      %p246 = scmp.eq.s32.totalorder %s30, 3
      %p247 = por %p245, %p246
      %p249 = scmp.ne.s32.totalorder %s232, %s248
      %p250 = scmp.eq.s32.totalorder %s30, 0
      %p251 = por %p249, %p250
      %s252 = ssub.s32 %s32, %s39
      %p253 = scmp.eq.s32.totalorder %s252, 0
      %s255 = sadd.s32 %s254, 1
      %s256 = scalar_select %p253, %s254, %s255
      %p259 = pneg %p253
      %p260 = scmp.eq.s32.totalorder %s24, 3
      %p261 = por %p259, %p260
      %p262 = scmp.ne.s32.totalorder %s254, %s257
      %p263 = scmp.eq.s32.totalorder %s24, 0
      %p264 = por %p262, %p263
      %p265 = scmp.ne.s32.totalorder %s254, %s257
      %p266 = scmp.eq.s32.totalorder %s29, 3
      %p267 = por %p265, %p266
      %p268 = scmp.ne.s32.totalorder %s257, %s258
      %p269 = scmp.eq.s32.totalorder %s29, 0
      %p270 = por %p268, %p269
      %p271 = scmp.ne.s32.totalorder %s257, %s258
      %p272 = scmp.eq.s32.totalorder %s30, 3
      %p273 = por %p271, %p272
      %p275 = scmp.ne.s32.totalorder %s258, %s274
      %p276 = scmp.eq.s32.totalorder %s30, 0
      %p277 = por %p275, %p276
      %s278 = ssub.s32 %s32, %s39
      %p279 = scmp.eq.s32.totalorder %s278, 0
      %s281 = sadd.s32 %s280, 1
      %s282 = scalar_select %p279, %s280, %s281
      %p285 = pneg %p279
      %p286 = scmp.eq.s32.totalorder %s24, 3
      %p287 = por %p285, %p286
      %p288 = scmp.ne.s32.totalorder %s280, %s283
      %p289 = scmp.eq.s32.totalorder %s24, 0
      %p290 = por %p288, %p289
      %p291 = scmp.ne.s32.totalorder %s280, %s283
      %p292 = scmp.eq.s32.totalorder %s29, 3
      %p293 = por %p291, %p292
      %p294 = scmp.ne.s32.totalorder %s283, %s284
      %p295 = scmp.eq.s32.totalorder %s29, 0
      %p296 = por %p294, %p295
      %p297 = scmp.ne.s32.totalorder %s283, %s284
      %p298 = scmp.eq.s32.totalorder %s30, 3
      %p299 = por %p297, %p298
      %p301 = scmp.ne.s32.totalorder %s284, %s300
      %p302 = scmp.eq.s32.totalorder %s30, 0
      %p303 = por %p301, %p302
      %s304 = ssub.s32 %s32, %s39
      %p305 = scmp.eq.s32.totalorder %s304, 0
      %s307 = sadd.s32 %s306, 1
      %s308 = scalar_select %p305, %s306, %s307
      %p311 = pneg %p305
      %p312 = scmp.eq.s32.totalorder %s24, 3
      %p313 = por %p311, %p312
      %p314 = scmp.ne.s32.totalorder %s306, %s309
      %p315 = scmp.eq.s32.totalorder %s24, 0
      %p316 = por %p314, %p315
      %p317 = scmp.ne.s32.totalorder %s306, %s309
      %p318 = scmp.eq.s32.totalorder %s29, 3
      %p319 = por %p317, %p318
      %p320 = scmp.ne.s32.totalorder %s309, %s310
      %p321 = scmp.eq.s32.totalorder %s29, 0
      %p322 = por %p320, %p321
      %p323 = scmp.ne.s32.totalorder %s309, %s310
      %p324 = scmp.eq.s32.totalorder %s30, 3
      %p325 = por %p323, %p324
      %p327 = scmp.ne.s32.totalorder %s310, %s326
      %p328 = scmp.eq.s32.totalorder %s30, 0
      %p329 = por %p327, %p328
      %s330 = ssub.s32 %s32, %s39
      %p331 = scmp.eq.s32.totalorder %s330, 0
      %s333 = sadd.s32 %s332, 1
      %s334 = scalar_select %p331, %s332, %s333
      %p337 = pneg %p331
      %p338 = scmp.eq.s32.totalorder %s24, 3
      %p339 = por %p337, %p338
      %p340 = scmp.ne.s32.totalorder %s332, %s335
      %p341 = scmp.eq.s32.totalorder %s24, 0
      %p342 = por %p340, %p341
      %p343 = scmp.ne.s32.totalorder %s332, %s335
      %p344 = scmp.eq.s32.totalorder %s29, 3
      %p345 = por %p343, %p344
      %p346 = scmp.ne.s32.totalorder %s335, %s336
      %p347 = scmp.eq.s32.totalorder %s29, 0
      %p348 = por %p346, %p347
      %p349 = scmp.ne.s32.totalorder %s335, %s336
      %p350 = scmp.eq.s32.totalorder %s30, 3
      %p351 = por %p349, %p350
      %p353 = scmp.ne.s32.totalorder %s336, %s352
      %p354 = scmp.eq.s32.totalorder %s30, 0
      %p355 = por %p353, %p354
      %s356 = ssub.s32 %s32, %s39
      %p357 = scmp.eq.s32.totalorder %s356, 0
      %s359 = sadd.s32 %s358, 1
      %s360 = scalar_select %p357, %s358, %s359
      %p363 = pneg %p357
      %p364 = scmp.eq.s32.totalorder %s24, 3
      %p365 = por %p363, %p364
      %p366 = scmp.ne.s32.totalorder %s358, %s361
      %p367 = scmp.eq.s32.totalorder %s24, 0
      %p368 = por %p366, %p367
      %p369 = scmp.ne.s32.totalorder %s358, %s361
      %p370 = scmp.eq.s32.totalorder %s29, 3
      %p371 = por %p369, %p370
      %p372 = scmp.ne.s32.totalorder %s361, %s362
      %p373 = scmp.eq.s32.totalorder %s29, 0
      %p374 = por %p372, %p373
      %p375 = scmp.ne.s32.totalorder %s361, %s362
      %p376 = scmp.eq.s32.totalorder %s30, 3
      %p377 = por %p375, %p376
      %p379 = scmp.ne.s32.totalorder %s362, %s378
      %p380 = scmp.eq.s32.totalorder %s30, 0
      %p381 = por %p379, %p380
      %s383 = sadd.s32 %s382, 1
      %p386 = scmp.eq.s32.totalorder %s24, 3
      %p387 = scmp.ne.s32.totalorder %s382, %s384
      %p388 = scmp.eq.s32.totalorder %s24, 0
      %p389 = por %p387, %p388
      %p390 = scmp.ne.s32.totalorder %s382, %s384
      %p391 = scmp.eq.s32.totalorder %s29, 3
      %p392 = por %p390, %p391
      %p393 = scmp.ne.s32.totalorder %s384, %s385
      %p394 = scmp.eq.s32.totalorder %s29, 0
      %p395 = por %p393, %p394
      %p396 = scmp.ne.s32.totalorder %s384, %s385
      %p397 = scmp.eq.s32.totalorder %s30, 3
      %p398 = por %p396, %p397
      %p400 = scmp.ne.s32.totalorder %s385, %s399
      %p401 = scmp.eq.s32.totalorder %s30, 0
      %p402 = por %p400, %p401
      %s404 = sadd.s32 %s403, 1
      %p407 = scmp.eq.s32.totalorder %s24, 3
      %p408 = scmp.ne.s32.totalorder %s403, %s405
      %p409 = scmp.eq.s32.totalorder %s24, 0
      %p410 = por %p408, %p409
      %p411 = scmp.ne.s32.totalorder %s403, %s405
      %p412 = scmp.eq.s32.totalorder %s29, 3
      %p413 = por %p411, %p412
      %p414 = scmp.ne.s32.totalorder %s405, %s406
      %p415 = scmp.eq.s32.totalorder %s29, 0
      %p416 = por %p414, %p415
      %p417 = scmp.ne.s32.totalorder %s405, %s406
      %p418 = scmp.eq.s32.totalorder %s30, 3
      %p419 = por %p417, %p418
      %p421 = scmp.ne.s32.totalorder %s406, %s420
      %p422 = scmp.eq.s32.totalorder %s30, 0
      %p423 = por %p421, %p422
      %s424 = ssub.s32 %s31, %s43
      %p425 = scmp.eq.s32.totalorder %s424, 0
      %s427 = sadd.s32 %s426, 1
      %s428 = scalar_select %p425, %s426, %s427
      %p431 = pneg %p425
      %p432 = scmp.eq.s32.totalorder %s24, 3
      %p433 = por %p431, %p432
      %p434 = scmp.ne.s32.totalorder %s426, %s429
      %p435 = scmp.eq.s32.totalorder %s24, 0
      %p436 = por %p434, %p435
      %p437 = scmp.ne.s32.totalorder %s426, %s429
      %p438 = scmp.eq.s32.totalorder %s29, 3
      %p439 = por %p437, %p438
      %p440 = scmp.ne.s32.totalorder %s429, %s430
      %p441 = scmp.eq.s32.totalorder %s29, 0
      %p442 = por %p440, %p441
      %p443 = scmp.ne.s32.totalorder %s429, %s430
      %p444 = scmp.eq.s32.totalorder %s30, 3
      %p445 = por %p443, %p444
      %p447 = scmp.ne.s32.totalorder %s430, %s446
      %p448 = scmp.eq.s32.totalorder %s30, 0
      %p449 = por %p447, %p448
      %p450 = scmp.le.s32.totalorder 1, %s24
      %p451 = scmp.lt.s32.totalorder %s24, 5
      %p452 = pnand %p450, %p451
      %p453 = pneg %p452
      // Predicated region
      $region9: #{tpu_custom_call.1} parent=5 // pred_check
        _
      $region10: #{tpu_custom_call.1} parent=5 // pred_check_branch
        %455 = sbr.rel (%p452) target = $region12
      $region11: #{tpu_custom_call.1} parent=5 // pred_region
        %s456 = ssub.s32 %s24, 1
        // Predicated region
        $region13: #{tpu_custom_call.1} parent=11 // pred_check
          %p457 = pneg %p395
        $region14: #{tpu_custom_call.1} parent=11 // pred_check_branch
          %459 = sbr.rel (%p457) target = $region16
        $region15: #{tpu_custom_call.1} parent=11 // pred_region
          _
        $region16: #{tpu_custom_call.1} parent=11 // pred_fallthru
          _
        // Predicated region
        $region17: #{tpu_custom_call.1} parent=11 // pred_check
          %p460 = pneg %p416
        $region18: #{tpu_custom_call.1} parent=11 // pred_check_branch
          %462 = sbr.rel (%p460) target = $region20
        $region19: #{tpu_custom_call.1} parent=11 // pred_region
          _
        $region20: #{tpu_custom_call.1} parent=11 // pred_fallthru
          _
      $region12: #{tpu_custom_call.1} parent=5 // pred_fallthru
        _
      %p463 = scmp.lt.s32.totalorder %s24, 4
      // Predicated region
      $region21: #{tpu_custom_call.1} parent=5 // pred_check
        %p464 = pneg %p463
      $region22: #{tpu_custom_call.1} parent=5 // pred_check_branch
        %466 = sbr.rel (%p464) target = $region24
      $region23: #{tpu_custom_call.1} parent=5 // pred_region
        // Predicated region
        $region25: #{tpu_custom_call.1} parent=23 // pred_check
          %p467 = pneg %p56
        $region26: #{tpu_custom_call.1} parent=23 // pred_check_branch
          %469 = sbr.rel (%p467) target = $region28
        $region27: #{tpu_custom_call.1} parent=23 // pred_region
          %s470 = smul.u32 2, %s31
          %p471 = scmp.lt.s32.totalorder %s470, 3
          %s472 = scalar_select %p471, %s470, 3
          %s473 = smul.addr %s472, 8
          %s474 = scalar_lea.vmem %s0, %s473
          %s475 = smul.u32 2, %s31
        $region28: #{tpu_custom_call.1} parent=23 // pred_fallthru
          _
        // Predicated region
        $region29: #{tpu_custom_call.1} parent=23 // pred_check
          %p476 = pneg %p82
        $region30: #{tpu_custom_call.1} parent=23 // pred_check_branch
          %478 = sbr.rel (%p476) target = $region32
        $region31: #{tpu_custom_call.1} parent=23 // pred_region
          %s479 = smul.u32 2, %s31
          %p480 = scmp.lt.s32.totalorder %s479, 3
          %s481 = scalar_select %p480, %s479, 3
          %s482 = scalar_lea.vmem %s1, %s481
          %s483 = smul.u32 2, %s31
        $region32: #{tpu_custom_call.1} parent=23 // pred_fallthru
          _
        // Predicated region
        $region33: #{tpu_custom_call.1} parent=23 // pred_check
          %p484 = pneg %p108
        $region34: #{tpu_custom_call.1} parent=23 // pred_check_branch
          %486 = sbr.rel (%p484) target = $region36
        $region35: #{tpu_custom_call.1} parent=23 // pred_region
          %p487 = scmp.lt.s32.totalorder %s32, 1
          %s488 = scalar_select %p487, %s32, 1
          %s489 = scalar_lea.vmem %s2, %s488
        $region36: #{tpu_custom_call.1} parent=23 // pred_fallthru
          _
        // Predicated region
        $region37: #{tpu_custom_call.1} parent=23 // pred_check
          %p490 = pneg %p134
        $region38: #{tpu_custom_call.1} parent=23 // pred_check_branch
          %492 = sbr.rel (%p490) target = $region40
        $region39: #{tpu_custom_call.1} parent=23 // pred_region
          %p493 = scmp.lt.s32.totalorder %s32, 1
          %s494 = scalar_select %p493, %s32, 1
          %s495 = scalar_lea.vmem %s3, %s494
        $region40: #{tpu_custom_call.1} parent=23 // pred_fallthru
          _
        // Predicated region
        $region41: #{tpu_custom_call.1} parent=23 // pred_check
          %p496 = pneg %p160
        $region42: #{tpu_custom_call.1} parent=23 // pred_check_branch
          %498 = sbr.rel (%p496) target = $region44
        $region43: #{tpu_custom_call.1} parent=23 // pred_region
          %p499 = scmp.lt.s32.totalorder %s32, 1
          %s500 = scalar_select %p499, %s32, 1
          %s501 = smul.addr %s500, 4
          %s502 = smul.addr %s501, 4
          %s503 = scalar_lea.vmem %s4, %s502
        $region44: #{tpu_custom_call.1} parent=23 // pred_fallthru
          _
        // Predicated region
        $region45: #{tpu_custom_call.1} parent=23 // pred_check
          %p504 = pneg %p186
        $region46: #{tpu_custom_call.1} parent=23 // pred_check_branch
          %506 = sbr.rel (%p504) target = $region48
        $region47: #{tpu_custom_call.1} parent=23 // pred_region
          %p507 = scmp.lt.s32.totalorder %s32, 1
          %s508 = scalar_select %p507, %s32, 1
          %s509 = smul.addr %s508, 2
          %s510 = smul.addr %s509, 4
          %s511 = scalar_lea.vmem %s5, %s510
        $region48: #{tpu_custom_call.1} parent=23 // pred_fallthru
          _
        // Predicated region
        $region49: #{tpu_custom_call.1} parent=23 // pred_check
          %p512 = pneg %p212
        $region50: #{tpu_custom_call.1} parent=23 // pred_check_branch
          %514 = sbr.rel (%p512) target = $region52
        $region51: #{tpu_custom_call.1} parent=23 // pred_region
          %p515 = scmp.lt.s32.totalorder %s32, 1
          %s516 = scalar_select %p515, %s32, 1
          %s517 = scalar_lea.vmem %s6, %s516
        $region52: #{tpu_custom_call.1} parent=23 // pred_fallthru
          _
        // Predicated region
        $region53: #{tpu_custom_call.1} parent=23 // pred_check
          %p518 = pneg %p238
        $region54: #{tpu_custom_call.1} parent=23 // pred_check_branch
          %520 = sbr.rel (%p518) target = $region56
        $region55: #{tpu_custom_call.1} parent=23 // pred_region
          %p521 = scmp.lt.s32.totalorder %s32, 1
          %s522 = scalar_select %p521, %s32, 1
          %s523 = scalar_lea.vmem %s7, %s522
        $region56: #{tpu_custom_call.1} parent=23 // pred_fallthru
          _
        // Predicated region
        $region57: #{tpu_custom_call.1} parent=23 // pred_check
          %p524 = pneg %p264
        $region58: #{tpu_custom_call.1} parent=23 // pred_check_branch
          %526 = sbr.rel (%p524) target = $region60
        $region59: #{tpu_custom_call.1} parent=23 // pred_region
          %p527 = scmp.lt.s32.totalorder %s32, 1
          %s528 = scalar_select %p527, %s32, 1
          %s529 = scalar_lea.vmem %s8, %s528
        $region60: #{tpu_custom_call.1} parent=23 // pred_fallthru
          _
        // Predicated region
        $region61: #{tpu_custom_call.1} parent=23 // pred_check
          %p530 = pneg %p290
        $region62: #{tpu_custom_call.1} parent=23 // pred_check_branch
          %532 = sbr.rel (%p530) target = $region64
        $region63: #{tpu_custom_call.1} parent=23 // pred_region
          %p533 = scmp.lt.s32.totalorder %s32, 1
          %s534 = scalar_select %p533, %s32, 1
          %s535 = smul.addr %s534, 4
          %s536 = smul.addr %s535, 4
          %s537 = scalar_lea.vmem %s9, %s536
        $region64: #{tpu_custom_call.1} parent=23 // pred_fallthru
          _
        // Predicated region
        $region65: #{tpu_custom_call.1} parent=23 // pred_check
          %p538 = pneg %p316
        $region66: #{tpu_custom_call.1} parent=23 // pred_check_branch
          %540 = sbr.rel (%p538) target = $region68
        $region67: #{tpu_custom_call.1} parent=23 // pred_region
          %p541 = scmp.lt.s32.totalorder %s32, 1
          %s542 = scalar_select %p541, %s32, 1
          %s543 = scalar_lea.vmem %s10, %s542
        $region68: #{tpu_custom_call.1} parent=23 // pred_fallthru
          _
        // Predicated region
        $region69: #{tpu_custom_call.1} parent=23 // pred_check
          %p544 = pneg %p342
        $region70: #{tpu_custom_call.1} parent=23 // pred_check_branch
          %546 = sbr.rel (%p544) target = $region72
        $region71: #{tpu_custom_call.1} parent=23 // pred_region
          %p547 = scmp.lt.s32.totalorder %s32, 1
          %s548 = scalar_select %p547, %s32, 1
          %s549 = smul.addr %s548, 16
          %s550 = smul.addr %s549, 4
          %s551 = scalar_lea.vmem %s11, %s550
        $region72: #{tpu_custom_call.1} parent=23 // pred_fallthru
          _
        // Predicated region
        $region73: #{tpu_custom_call.1} parent=23 // pred_check
          %p552 = pneg %p368
        $region74: #{tpu_custom_call.1} parent=23 // pred_check_branch
          %554 = sbr.rel (%p552) target = $region76
        $region75: #{tpu_custom_call.1} parent=23 // pred_region
          %p555 = scmp.lt.s32.totalorder %s32, 1
          %s556 = scalar_select %p555, %s32, 1
          %s557 = scalar_lea.vmem %s12, %s556
        $region76: #{tpu_custom_call.1} parent=23 // pred_fallthru
          _
      $region24: #{tpu_custom_call.1} parent=5 // pred_fallthru
        _
      %p558 = scmp.le.s32.totalorder 1, %s24
      %p559 = scmp.lt.s32.totalorder %s24, 5
      %p560 = pnand %p558, %p559
      %p561 = pneg %p560
      // Predicated region
      $region77: #{tpu_custom_call.1} parent=5 // pred_check
        _
      $region78: #{tpu_custom_call.1} parent=5 // pred_check_branch
        %563 = sbr.rel (%p560) target = $region80
      $region79: #{tpu_custom_call.1} parent=5 // pred_region
        %s564 = ssub.s32 %s24, 1
        %s565 = smul.u32 2, %s33
        %p566 = scmp.lt.s32.totalorder %s565, 3
        %s567 = scalar_select %p566, %s565, 3
        %s568 = smul.addr %s567, 8
        %s569 = scalar_lea.vmem %s0, %s568
        %p570 = pneg %p62
        %p571 = pneg %p59
        %s572 = smul.u32 2, %s33
        %p573 = scmp.lt.s32.totalorder %s572, 3
        %s574 = scalar_select %p573, %s572, 3
        %s575 = scalar_lea.vmem %s1, %s574
        %p576 = pneg %p88
        %p577 = pneg %p85
        %p578 = scmp.lt.s32.totalorder %s34, 1
        %s579 = scalar_select %p578, %s34, 1
        %s580 = scalar_lea.vmem %s2, %s579
        %p581 = pneg %p114
        %p582 = pneg %p111
        %p583 = scmp.lt.s32.totalorder %s34, 1
        %s584 = scalar_select %p583, %s34, 1
        %s585 = scalar_lea.vmem %s3, %s584
        %p586 = pneg %p140
        %p587 = pneg %p137
        %p588 = scmp.lt.s32.totalorder %s34, 1
        %s589 = scalar_select %p588, %s34, 1
        %s590 = smul.addr %s589, 4
        %s591 = smul.addr %s590, 4
        %s592 = scalar_lea.vmem %s4, %s591
        %p593 = pneg %p166
        %p594 = pneg %p163
        %p595 = scmp.lt.s32.totalorder %s34, 1
        %s596 = scalar_select %p595, %s34, 1
        %s597 = smul.addr %s596, 2
        %s598 = smul.addr %s597, 4
        %s599 = scalar_lea.vmem %s5, %s598
        %p600 = pneg %p192
        %p601 = pneg %p189
        %p602 = scmp.lt.s32.totalorder %s34, 1
        %s603 = scalar_select %p602, %s34, 1
        %s604 = scalar_lea.vmem %s6, %s603
        %p605 = pneg %p218
        %p606 = pneg %p215
        %p607 = scmp.lt.s32.totalorder %s34, 1
        %s608 = scalar_select %p607, %s34, 1
        %s609 = scalar_lea.vmem %s7, %s608
        %p610 = pneg %p244
        %p611 = pneg %p241
        %p612 = scmp.lt.s32.totalorder %s34, 1
        %s613 = scalar_select %p612, %s34, 1
        %s614 = scalar_lea.vmem %s8, %s613
        %p615 = pneg %p270
        %p616 = pneg %p267
        %p617 = scmp.lt.s32.totalorder %s34, 1
        %s618 = scalar_select %p617, %s34, 1
        %s619 = smul.addr %s618, 4
        %s620 = smul.addr %s619, 4
        %s621 = scalar_lea.vmem %s9, %s620
        %p622 = pneg %p296
        %p623 = pneg %p293
        %p624 = scmp.lt.s32.totalorder %s34, 1
        %s625 = scalar_select %p624, %s34, 1
        %s626 = scalar_lea.vmem %s10, %s625
        %p627 = pneg %p322
        %p628 = pneg %p319
        %p629 = scmp.lt.s32.totalorder %s34, 1
        %s630 = scalar_select %p629, %s34, 1
        %s631 = smul.addr %s630, 16
        %s632 = smul.addr %s631, 4
        %s633 = scalar_lea.vmem %s11, %s632
        %p634 = pneg %p348
        %p635 = pneg %p345
        %p636 = scmp.lt.s32.totalorder %s34, 1
        %s637 = scalar_select %p636, %s34, 1
        %s638 = scalar_lea.vmem %s12, %s637
        %p639 = pneg %p374
        %p640 = pneg %p371
        %p641 = pneg %p395
        %p642 = pneg %p392
        %p643 = pneg %p416
        %p644 = pneg %p413
        %p645 = pneg %p442
        %p646 = pneg %p439
        %s647 = sand.u32 %s429, 1
        %s648 = scalar_lea.sflag [#allocation3], %s647
        %s649 = sand.u32 %s429, 1
        %s650 = smul.addr %s649, 16
        %s651 = scalar_lea.vmem [#allocation2], %s650
        %s652 = smul.u32 2, %s33
        %p653 = scmp.lt.s32.totalorder %s652, 3
        %s654 = scalar_select %p653, %s652, 3
        %s655 = smul.addr %s654, 8
        %s656 = scalar_lea.vmem %s0, %s655
        %s657 = smul.u32 2, %s33
        %s658 = smul.u32 2, %s33
        %p659 = scmp.lt.s32.totalorder %s658, 3
        %s660 = scalar_select %p659, %s658, 3
        %s661 = scalar_lea.vmem %s1, %s660
        %s662 = smul.u32 2, %s33
        %p663 = scmp.lt.s32.totalorder %s34, 1
        %s664 = scalar_select %p663, %s34, 1
        %s665 = scalar_lea.vmem %s2, %s664
        %p666 = scmp.lt.s32.totalorder %s34, 1
        %s667 = scalar_select %p666, %s34, 1
        %s668 = scalar_lea.vmem %s3, %s667
        %p669 = scmp.lt.s32.totalorder %s34, 1
        %s670 = scalar_select %p669, %s34, 1
        %s671 = smul.addr %s670, 4
        %s672 = smul.addr %s671, 4
        %s673 = scalar_lea.vmem %s4, %s672
        %p674 = scmp.lt.s32.totalorder %s34, 1
        %s675 = scalar_select %p674, %s34, 1
        %s676 = smul.addr %s675, 2
        %s677 = smul.addr %s676, 4
        %s678 = scalar_lea.vmem %s5, %s677
        %p679 = scmp.lt.s32.totalorder %s34, 1
        %s680 = scalar_select %p679, %s34, 1
        %s681 = scalar_lea.vmem %s6, %s680
        %p682 = scmp.lt.s32.totalorder %s34, 1
        %s683 = scalar_select %p682, %s34, 1
        %s684 = scalar_lea.vmem %s7, %s683
        %p685 = scmp.lt.s32.totalorder %s34, 1
        %s686 = scalar_select %p685, %s34, 1
        %s687 = scalar_lea.vmem %s8, %s686
        %p688 = scmp.lt.s32.totalorder %s34, 1
        %s689 = scalar_select %p688, %s34, 1
        %s690 = smul.addr %s689, 4
        %s691 = smul.addr %s690, 4
        %s692 = scalar_lea.vmem %s9, %s691
        %p693 = scmp.lt.s32.totalorder %s34, 1
        %s694 = scalar_select %p693, %s34, 1
        %s695 = scalar_lea.vmem %s10, %s694
        %p696 = scmp.lt.s32.totalorder %s34, 1
        %s697 = scalar_select %p696, %s34, 1
        %s698 = smul.addr %s697, 16
        %s699 = smul.addr %s698, 4
        %s700 = scalar_lea.vmem %s11, %s699
        %p701 = scmp.lt.s32.totalorder %s34, 1
        %s702 = scalar_select %p701, %s34, 1
        %s703 = scalar_lea.vmem %s12, %s702
        %s704 = smul.u32 2, %s33
        %p706 = scmp.eq.s32.totalorder %s34, 0
        // Predicated region
        $region81: #{tpu_custom_call.1} parent=79 // pred_check
          %p707 = pneg %p706
        $region82: #{tpu_custom_call.1} parent=79 // pred_check_branch
          %709 = sbr.rel (%p707) target = $region84
        $region83: #{tpu_custom_call.1} parent=79 // pred_region
          %v710 = vld [vmem:[%s656] sm:$0xff]
          %v711 = vld [vmem:[%s656 + $0x8] sm:$0xff]
          %vm712 = vcmask 261120
          %713 = vst.msk [vmem:[%s651] sm:$0xff] %vm712, %v710
          %714 = vst.msk [vmem:[%s651 + $0x8] sm:$0xff] %vm712, %v711
        $region84: #{tpu_custom_call.1} parent=79 // pred_fallthru
          _
        %v715 = vld [vmem:[%s651] sm:$0xff]
        %v716 = vld [vmem:[%s651 + $0x8] sm:$0xff]
        %v717 = vld [vmem:[%s665] sm:$0x1]
        %v718 = vld [vmem:[%s668] sm:$0x1]
        %vm719 = vcmask 261120
        %v720 = vsel %vm719, %v715, 0.0
        %721 = vadd.xlane.f32.xlu0 %v720
        %v722 = vpop.xlane.xlu0 %721
        %v723 = vsel %vm719, %v716, 0.0
        %724 = vadd.xlane.f32.xlu0 %v723
        %v725 = vpop.xlane.xlu0 %724
        %v726 = vrcp.pop 32.0
        %v727 = vmul.f32 32.0, %v726
        %v728 = vsub.f32 1.0, %v727
        %v729 = vmul.f32 %v726, %v728
        %v730 = vadd.f32 %v726, %v729
        %vm731 = vweird.f32 %v726
        %v732 = vsel %vm731, %v726, %v730
        %v733 = vmul.f32 %v722, %v732
        %v734 = vmul.f32 %v725, %v732
        %v735 = vsub.f32 %v715, %v733
        %v736 = vsub.f32 %v716, %v734
        %v737 = vmul.f32 %v735, %v735
        %v738 = vmul.f32 %v736, %v736
        %v739 = vsel %vm719, %v737, 0.0
        %740 = vadd.xlane.f32.xlu0 %v739
        %v741 = vpop.xlane.xlu0 %740
        %v742 = vsel %vm719, %v738, 0.0
        %743 = vadd.xlane.f32.xlu0 %v742
        %v744 = vpop.xlane.xlu0 %743
        %v745 = vmul.f32 %v741, %v732
        %v746 = vmul.f32 %v744, %v732
        %v747 = vadd.f32 %v745, 1e-05
        %v748 = vadd.f32 %v746, 1e-05
        %v749 = vrsqrt.pop %v747
        %v750 = vmul.f32 %v749, %v747
        %v751 = vmul.f32 %v750, %v749
        %v752 = vmul.f32 0.5, %v751
        %v753 = vsub.f32 1.5, %v752
        %v754 = vmul.f32 %v749, %v753
        %vm755 = vweird.f32 %v747
        %vm756 = vweird.f32 %v749
        %vm757 = vmor %vm755, %vm756
        %v758 = vsel %vm757, %v749, %v754
        %v759 = vrsqrt.pop %v748
        %v760 = vmul.f32 %v759, %v748
        %v761 = vmul.f32 %v760, %v759
        %v762 = vmul.f32 0.5, %v761
        %v763 = vsub.f32 1.5, %v762
        %v764 = vmul.f32 %v759, %v763
        %vm765 = vweird.f32 %v748
        %vm766 = vweird.f32 %v759
        %vm767 = vmor %vm765, %vm766
        %v768 = vsel %vm767, %v759, %v764
        %v769 = vmul.f32 %v735, %v758
        %v770 = vmul.f32 %v736, %v768
        %v772 = vperm.slane %v717, 0
        %v774 = vmul.f32 %v769, %v772
        %v775 = vmul.f32 %v770, %v772
        %v777 = vperm.slane %v718, 0
        %v779 = vadd.f32 %v774, %v777
        %v780 = vadd.f32 %v775, %v777
        %v781 = vpack.c.bf16 %v780, %v779
        %v782 = vld [vmem:[%s673] sm:$0xf]
        %v783 = vld [vmem:[%s673 + $0x4] sm:$0xf]
        %v784 = vld [vmem:[%s673 + $0x8] sm:$0xf]
        %v785 = vld [vmem:[%s673 + $0xc] sm:$0xf]
        %v790 = vunpack.c.l.b16 %v782
        %v791 = vunpack.c.l.b16 %v783
        %v792 = vunpack.c.l.b16 %v784
        %v793 = vunpack.c.l.b16 %v785
        %v794 = vpack.c.b16 %v791, %v790
        %v795 = vpack.c.b16 %v793, %v792
        %v799 = vsel %vm719, %v781, 0
        %801 = vmatpush.bf16.msra.mxu0 0
        %802 = vmatpush.bf16.msra.mxu0 0
        %803 = vmatpush.bf16.msra.mxu0 0
        %804 = vmatpush.bf16.msra.mxu0 0
        %805 = vmatpush.bf16.msra.mxu0 0
        %806 = vmatpush.bf16.msra.mxu0 0
        %807 = vmatpush.bf16.msra.mxu0 %v795
        %808 = vmatpush.bf16.msra.mxu0 %v794
        %809 = vmatmul.bf16.gmra.mxu0 %v799
        %v810 = vpop.f32.mrf.mxu0
        %v811 = vadd.f32 0.0, %v810
        %v812 = vpop.f32.mrf.mxu0
        %v813 = vadd.f32 0.0, %v812
        %814 = vdwg.mxu0
        %v815 = vld [vmem:[%s661] sm:$0x1]
        %v816 = vpack.c.bf16 %v811, %v811
        %818 = vrot.lane.b32.xlu0 %v816, 112
        %v819 = vpop.permute.xlu0 %818
        %vm820 = vcmask 64512
        %v822 = vsel %vm820, %v816, 0
        %v825 = vsel %vm820, %v819, 0
        %827 = vmatpush.bf16.xpose.msra.mxu0 0
        %828 = vmatpush.bf16.xpose.msra.mxu0 0
        %829 = vmatpush.bf16.xpose.msra.mxu0 0
        %830 = vmatpush.bf16.xpose.msra.mxu0 0
        %831 = vmatpush.bf16.xpose.msra.mxu0 0
        %832 = vmatpush.bf16.xpose.msra.mxu0 0
        %833 = vmatpush.bf16.xpose.msra.mxu0 0
        %834 = vmatpush.bf16.xpose.msra.mxu0 %v825
        %835 = vmatmul.bf16.gmra.mxu0 %v822
        %v836 = vpop.f32.mrf.mxu0
        %v837 = vadd.f32 0.0, %v836
        %v838 = vpop.f32.mrf.mxu0
        %839 = vdwg.mxu0
        %v840 = vmul.f32 %v837, 0.35355338
        %v842 = vperm.slane %v815, 0
        %v844 = vadd.f32 %v840, %v842
        %v845 = vsel %vm820, %v844, -inf
        %846 = vmax.xlane.f32.xlu0 %v845
        %v847 = vpop.xlane.xlu0 %846
        %v848 = vsub.f32 %v844, %v847
        %v849 = vmul.f32 %v848, 1.442695
        %v850 = vpow.pop %v849
        %v851 = vsel %vm820, %v850, 0.0
        %852 = vadd.xlane.f32.xlu0 %v851
        %v853 = vpop.xlane.xlu0 %852
        %v854 = vrcp.pop %v853
        %v855 = vmul.f32 %v850, %v854
        %v856 = vpack.c.bf16 %v855, %v855
        %857 = vrot.lane.b32.xlu0 %v816, 96
        %v858 = vpop.permute.xlu0 %857
        %v860 = vsel %vm820, %v856, 0
        %vm862 = vcmask 1043456
        %v864 = vsel %vm862, %v858, 0
        %866 = vmatpush.bf16.msra.mxu0 0
        %867 = vmatpush.bf16.msra.mxu0 0
        %868 = vmatpush.bf16.msra.mxu0 0
        %869 = vmatpush.bf16.msra.mxu0 0
        %870 = vmatpush.bf16.msra.mxu0 0
        %871 = vmatpush.bf16.msra.mxu0 0
        %872 = vmatpush.bf16.msra.mxu0 0
        %873 = vmatpush.bf16.msra.mxu0 %v864
        %874 = vmatmul.bf16.gmra.mxu0 %v860
        %v875 = vpop.f32.mrf.mxu0
        %v876 = vadd.f32 0.0, %v875
        %v877 = vpop.f32.mrf.mxu0
        %878 = vdwg.mxu0
        %879 = vrot.lane.b32.xlu0 %v816, 120
        %v880 = vpop.permute.xlu0 %879
        %881 = vrot.lane.b32.xlu0 %v816, 104
        %v882 = vpop.permute.xlu0 %881
        %v884 = vsel %vm820, %v880, 0
        %v887 = vsel %vm820, %v882, 0
        %889 = vmatpush.bf16.xpose.msra.mxu0 0
        %890 = vmatpush.bf16.xpose.msra.mxu0 0
        %891 = vmatpush.bf16.xpose.msra.mxu0 0
        %892 = vmatpush.bf16.xpose.msra.mxu0 0
        %893 = vmatpush.bf16.xpose.msra.mxu0 0
        %894 = vmatpush.bf16.xpose.msra.mxu0 0
        %895 = vmatpush.bf16.xpose.msra.mxu0 0
        %896 = vmatpush.bf16.xpose.msra.mxu0 %v887
        %897 = vmatmul.bf16.gmra.mxu0 %v884
        %v898 = vpop.f32.mrf.mxu0
        %v899 = vadd.f32 0.0, %v898
        %v900 = vpop.f32.mrf.mxu0
        %901 = vdwg.mxu0
        %v902 = vmul.f32 %v899, 0.35355338
        %v903 = vadd.f32 %v902, %v842
        %v904 = vsel %vm820, %v903, -inf
        %905 = vmax.xlane.f32.xlu0 %v904
        %v906 = vpop.xlane.xlu0 %905
        %v907 = vsub.f32 %v903, %v906
        %v908 = vmul.f32 %v907, 1.442695
        %v909 = vpow.pop %v908
        %v910 = vsel %vm820, %v909, 0.0
        %911 = vadd.xlane.f32.xlu0 %v910
        %v912 = vpop.xlane.xlu0 %911
        %v913 = vrcp.pop %v912
        %v914 = vmul.f32 %v909, %v913
        %v915 = vpack.c.bf16 %v914, %v914
        %916 = vrot.lane.b32.xlu0 %v816, 88
        %v917 = vpop.permute.xlu0 %916
        %v919 = vsel %vm820, %v915, 0
        %v922 = vsel %vm862, %v917, 0
        %924 = vmatpush.bf16.msra.mxu0 0
        %925 = vmatpush.bf16.msra.mxu0 0
        %926 = vmatpush.bf16.msra.mxu0 0
        %927 = vmatpush.bf16.msra.mxu0 0
        %928 = vmatpush.bf16.msra.mxu0 0
        %929 = vmatpush.bf16.msra.mxu0 0
        %930 = vmatpush.bf16.msra.mxu0 0
        %931 = vmatpush.bf16.msra.mxu0 %v922
        %932 = vmatmul.bf16.gmra.mxu0 %v919
        %v933 = vpop.f32.mrf.mxu0
        %v934 = vadd.f32 0.0, %v933
        %v935 = vpop.f32.mrf.mxu0
        %936 = vdwg.mxu0
        %938 = vrot.lane.b32.xlu0 %v934, 8
        %v939 = vpop.permute.xlu0 %938
        %v941 = vsel %vm820, %v876, %v939
        %s942 = scalar_lea.vmem %s661, 1
        %v943 = vld [vmem:[%s942] sm:$0x1]
        %v944 = vpack.c.bf16 %v813, %v813
        %946 = vrot.lane.b32.xlu0 %v944, 112
        %v947 = vpop.permute.xlu0 %946
        %v949 = vsel %vm820, %v944, 0
        %v952 = vsel %vm820, %v947, 0
        %954 = vmatpush.bf16.xpose.msra.mxu0 0
        %955 = vmatpush.bf16.xpose.msra.mxu0 0
        %956 = vmatpush.bf16.xpose.msra.mxu0 0
        %957 = vmatpush.bf16.xpose.msra.mxu0 0
        %958 = vmatpush.bf16.xpose.msra.mxu0 0
        %959 = vmatpush.bf16.xpose.msra.mxu0 0
        %960 = vmatpush.bf16.xpose.msra.mxu0 0
        %961 = vmatpush.bf16.xpose.msra.mxu0 %v952
        %962 = vmatmul.bf16.gmra.mxu0 %v949
        %v963 = vpop.f32.mrf.mxu0
        %v964 = vadd.f32 0.0, %v963
        %v965 = vpop.f32.mrf.mxu0
        %966 = vdwg.mxu0
        %v967 = vmul.f32 %v964, 0.35355338
        %v969 = vperm.slane %v943, 0
        %v971 = vadd.f32 %v967, %v969
        %v972 = vsel %vm820, %v971, -inf
        %973 = vmax.xlane.f32.xlu0 %v972
        %v974 = vpop.xlane.xlu0 %973
        %v975 = vsub.f32 %v971, %v974
        %v976 = vmul.f32 %v975, 1.442695
        %v977 = vpow.pop %v976
        %v978 = vsel %vm820, %v977, 0.0
        %979 = vadd.xlane.f32.xlu0 %v978
        %v980 = vpop.xlane.xlu0 %979
        %v981 = vrcp.pop %v980
        %v982 = vmul.f32 %v977, %v981
        %v983 = vpack.c.bf16 %v982, %v982
        %984 = vrot.lane.b32.xlu0 %v944, 96
        %v985 = vpop.permute.xlu0 %984
        %v987 = vsel %vm820, %v983, 0
        %v990 = vsel %vm862, %v985, 0
        %992 = vmatpush.bf16.msra.mxu0 0
        %993 = vmatpush.bf16.msra.mxu0 0
        %994 = vmatpush.bf16.msra.mxu0 0
        %995 = vmatpush.bf16.msra.mxu0 0
        %996 = vmatpush.bf16.msra.mxu0 0
        %997 = vmatpush.bf16.msra.mxu0 0
        %998 = vmatpush.bf16.msra.mxu0 0
        %999 = vmatpush.bf16.msra.mxu0 %v990
        %1000 = vmatmul.bf16.gmra.mxu0 %v987
        %v1001 = vpop.f32.mrf.mxu0
        %v1002 = vadd.f32 0.0, %v1001
        %v1003 = vpop.f32.mrf.mxu0
        %1004 = vdwg.mxu0
        %1005 = vrot.lane.b32.xlu0 %v944, 120
        %v1006 = vpop.permute.xlu0 %1005
        %1007 = vrot.lane.b32.xlu0 %v944, 104
        %v1008 = vpop.permute.xlu0 %1007
        %v1010 = vsel %vm820, %v1006, 0
        %v1013 = vsel %vm820, %v1008, 0
        %1015 = vmatpush.bf16.xpose.msra.mxu0 0
        %1016 = vmatpush.bf16.xpose.msra.mxu0 0
        %1017 = vmatpush.bf16.xpose.msra.mxu0 0
        %1018 = vmatpush.bf16.xpose.msra.mxu0 0
        %1019 = vmatpush.bf16.xpose.msra.mxu0 0
        %1020 = vmatpush.bf16.xpose.msra.mxu0 0
        %1021 = vmatpush.bf16.xpose.msra.mxu0 0
        %1022 = vmatpush.bf16.xpose.msra.mxu0 %v1013
        %1023 = vmatmul.bf16.gmra.mxu0 %v1010
        %v1024 = vpop.f32.mrf.mxu0
        %v1025 = vadd.f32 0.0, %v1024
        %v1026 = vpop.f32.mrf.mxu0
        %1027 = vdwg.mxu0
        %v1028 = vmul.f32 %v1025, 0.35355338
        %v1029 = vadd.f32 %v1028, %v969
        %v1030 = vsel %vm820, %v1029, -inf
        %1031 = vmax.xlane.f32.xlu0 %v1030
        %v1032 = vpop.xlane.xlu0 %1031
        %v1033 = vsub.f32 %v1029, %v1032
        %v1034 = vmul.f32 %v1033, 1.442695
        %v1035 = vpow.pop %v1034
        %v1036 = vsel %vm820, %v1035, 0.0
        %1037 = vadd.xlane.f32.xlu0 %v1036
        %v1038 = vpop.xlane.xlu0 %1037
        %v1039 = vrcp.pop %v1038
        %v1040 = vmul.f32 %v1035, %v1039
        %v1041 = vpack.c.bf16 %v1040, %v1040
        %1042 = vrot.lane.b32.xlu0 %v944, 88
        %v1043 = vpop.permute.xlu0 %1042
        %v1045 = vsel %vm820, %v1041, 0
        %v1048 = vsel %vm862, %v1043, 0
        %1050 = vmatpush.bf16.msra.mxu0 0
        %1051 = vmatpush.bf16.msra.mxu0 0
        %1052 = vmatpush.bf16.msra.mxu0 0
        %1053 = vmatpush.bf16.msra.mxu0 0
        %1054 = vmatpush.bf16.msra.mxu0 0
        %1055 = vmatpush.bf16.msra.mxu0 0
        %1056 = vmatpush.bf16.msra.mxu0 0
        %1057 = vmatpush.bf16.msra.mxu0 %v1048
        %1058 = vmatmul.bf16.gmra.mxu0 %v1045
        %v1059 = vpop.f32.mrf.mxu0
        %v1060 = vadd.f32 0.0, %v1059
        %v1061 = vpop.f32.mrf.mxu0
        %1062 = vdwg.mxu0
        %1064 = vrot.lane.b32.xlu0 %v1060, 8
        %v1065 = vpop.permute.xlu0 %1064
        %v1067 = vsel %vm820, %v1002, %v1065
        %v1068 = vpack.c.bf16 %v1067, %v941
        %v1069 = vld [vmem:[%s678] sm:$0xf]
        %v1070 = vld [vmem:[%s678 + $0x4] sm:$0xf]
        %v1073 = vunpack.c.l.b16 %v1069
        %v1074 = vunpack.c.l.b16 %v1070
        %v1075 = vpack.c.b16 %v1074, %v1073
        %vm1077 = vcmask 130048
        %v1079 = vsel %vm1077, %v1068, 0
        %1081 = vmatpush.bf16.msra.mxu0 0
        %1082 = vmatpush.bf16.msra.mxu0 0
        %1083 = vmatpush.bf16.msra.mxu0 0
        %1084 = vmatpush.bf16.msra.mxu0 0
        %1085 = vmatpush.bf16.msra.mxu0 0
        %1086 = vmatpush.bf16.msra.mxu0 0
        %1087 = vmatpush.bf16.msra.mxu0 0
        %1088 = vmatpush.bf16.msra.mxu0 %v1075
        %1089 = vmatmul.bf16.gmra.mxu0 %v1079
        %v1090 = vpop.f32.mrf.mxu0
        %v1091 = vadd.f32 0.0, %v1090
        %v1092 = vpop.f32.mrf.mxu0
        %v1093 = vadd.f32 0.0, %v1092
        %1094 = vdwg.mxu0
        %v1095 = vadd.f32 %v715, %v1091
        %v1096 = vadd.f32 %v716, %v1093
        %v1097 = vld [vmem:[%s681] sm:$0x1]
        %v1099 = vperm.slane %v1097, 0
        %v1101 = vadd.f32 %v1095, %v1099
        %v1102 = vadd.f32 %v1096, %v1099
        %v1103 = vld [vmem:[%s684] sm:$0x1]
        %v1104 = vld [vmem:[%s687] sm:$0x1]
        %v1105 = vsel %vm719, %v1101, 0.0
        %1106 = vadd.xlane.f32.xlu0 %v1105
        %v1107 = vpop.xlane.xlu0 %1106
        %v1108 = vsel %vm719, %v1102, 0.0
        %1109 = vadd.xlane.f32.xlu0 %v1108
        %v1110 = vpop.xlane.xlu0 %1109
        %v1111 = vmul.f32 %v1107, %v732
        %v1112 = vmul.f32 %v1110, %v732
        %v1113 = vsub.f32 %v1101, %v1111
        %v1114 = vsub.f32 %v1102, %v1112
        %v1115 = vmul.f32 %v1113, %v1113
        %v1116 = vmul.f32 %v1114, %v1114
        %v1117 = vsel %vm719, %v1115, 0.0
        %1118 = vadd.xlane.f32.xlu0 %v1117
        %v1119 = vpop.xlane.xlu0 %1118
        %v1120 = vsel %vm719, %v1116, 0.0
        %1121 = vadd.xlane.f32.xlu0 %v1120
        %v1122 = vpop.xlane.xlu0 %1121
        %v1123 = vmul.f32 %v1119, %v732
        %v1124 = vmul.f32 %v1122, %v732
        %v1125 = vadd.f32 %v1123, 1e-05
        %v1126 = vadd.f32 %v1124, 1e-05
        %v1127 = vrsqrt.pop %v1125
        %v1128 = vmul.f32 %v1127, %v1125
        %v1129 = vmul.f32 %v1128, %v1127
        %v1130 = vmul.f32 0.5, %v1129
        %v1131 = vsub.f32 1.5, %v1130
        %v1132 = vmul.f32 %v1127, %v1131
        %vm1133 = vweird.f32 %v1125
        %vm1134 = vweird.f32 %v1127
        %vm1135 = vmor %vm1133, %vm1134
        %v1136 = vsel %vm1135, %v1127, %v1132
        %v1137 = vrsqrt.pop %v1126
        %v1138 = vmul.f32 %v1137, %v1126
        %v1139 = vmul.f32 %v1138, %v1137
        %v1140 = vmul.f32 0.5, %v1139
        %v1141 = vsub.f32 1.5, %v1140
        %v1142 = vmul.f32 %v1137, %v1141
        %vm1143 = vweird.f32 %v1126
        %vm1144 = vweird.f32 %v1137
        %vm1145 = vmor %vm1143, %vm1144
        %v1146 = vsel %vm1145, %v1137, %v1142
        %v1147 = vmul.f32 %v1113, %v1136
        %v1148 = vmul.f32 %v1114, %v1146
        %v1150 = vperm.slane %v1103, 0
        %v1152 = vmul.f32 %v1147, %v1150
        %v1153 = vmul.f32 %v1148, %v1150
        %v1155 = vperm.slane %v1104, 0
        %v1157 = vadd.f32 %v1152, %v1155
        %v1158 = vadd.f32 %v1153, %v1155
        %v1159 = vpack.c.bf16 %v1158, %v1157
        %v1160 = vld [vmem:[%s692] sm:$0xf]
        %v1161 = vld [vmem:[%s692 + $0x4] sm:$0xf]
        %v1162 = vld [vmem:[%s692 + $0x8] sm:$0xf]
        %v1163 = vld [vmem:[%s692 + $0xc] sm:$0xf]
        %v1164 = vld [vmem:[%s695] sm:$0x1]
        %v1166 = vperm.slane %v1164, 0
        %v1172 = vunpack.c.l.b16 %v1160
        %v1173 = vunpack.c.l.b16 %v1161
        %v1174 = vunpack.c.l.b16 %v1162
        %v1175 = vunpack.c.l.b16 %v1163
        %v1176 = vpack.c.b16 %v1173, %v1172
        %v1177 = vpack.c.b16 %v1175, %v1174
        %v1181 = vsel %vm719, %v1159, 0
        %1183 = vmatpush.bf16.msra.mxu0 0
        %1184 = vmatpush.bf16.msra.mxu0 0
        %1185 = vmatpush.bf16.msra.mxu0 0
        %1186 = vmatpush.bf16.msra.mxu0 0
        %1187 = vmatpush.bf16.msra.mxu0 0
        %1188 = vmatpush.bf16.msra.mxu0 0
        %1189 = vmatpush.bf16.msra.mxu0 %v1177
        %1190 = vmatpush.bf16.msra.mxu0 %v1176
        %1191 = vmatmul.bf16.gmra.mxu0 %v1181
        %v1192 = vpop.f32.mrf.mxu0
        %v1193 = vadd.f32 %v1166, %v1192
        %v1194 = vpop.f32.mrf.mxu0
        %v1195 = vadd.f32 %v1166, %v1194
        %1196 = vdwg.mxu0
        %v1197 = vmul.f32 %v1193, %v1193
        %v1198 = vmul.f32 %v1195, %v1195
        %v1199 = vmul.f32 %v1193, %v1197
        %v1200 = vmul.f32 %v1195, %v1198
        %v1201 = vmul.f32 %v1199, 0.044715
        %v1202 = vmul.f32 %v1200, 0.044715
        %v1203 = vadd.f32 %v1193, %v1201
        %v1204 = vadd.f32 %v1195, %v1202
        %v1205 = vmul.f32 %v1203, 0.7978846
        %v1206 = vmul.f32 %v1204, 0.7978846
        %v1207 = vtanh.pop %v1205
        %v1208 = vtanh.pop %v1206
        %v1209 = vadd.f32 %v1207, 1.0
        %v1210 = vadd.f32 %v1208, 1.0
        %v1211 = vmul.f32 %v1209, 0.5
        %v1212 = vmul.f32 %v1210, 0.5
        %v1213 = vmul.f32 %v1193, %v1211
        %v1214 = vmul.f32 %v1195, %v1212
        %v1215 = vpack.c.bf16 %v1214, %v1213
        %v1216 = vld [vmem:[%s700] sm:$0xf]
        %v1217 = vld [vmem:[%s700 + $0x4] sm:$0xf]
        %v1218 = vld [vmem:[%s700 + $0x8] sm:$0xf]
        %v1219 = vld [vmem:[%s700 + $0xc] sm:$0xf]
        %v1220 = vld [vmem:[%s700 + $0x10] sm:$0xf]
        %v1221 = vld [vmem:[%s700 + $0x14] sm:$0xf]
        %v1222 = vld [vmem:[%s700 + $0x18] sm:$0xf]
        %v1223 = vld [vmem:[%s700 + $0x1c] sm:$0xf]
        %v1224 = vld [vmem:[%s700 + $0x20] sm:$0xf]
        %v1225 = vld [vmem:[%s700 + $0x24] sm:$0xf]
        %v1226 = vld [vmem:[%s700 + $0x28] sm:$0xf]
        %v1227 = vld [vmem:[%s700 + $0x2c] sm:$0xf]
        %v1228 = vld [vmem:[%s700 + $0x30] sm:$0xf]
        %v1229 = vld [vmem:[%s700 + $0x34] sm:$0xf]
        %v1230 = vld [vmem:[%s700 + $0x38] sm:$0xf]
        %v1231 = vld [vmem:[%s700 + $0x3c] sm:$0xf]
        %v1248 = vunpack.c.l.b16 %v1216
        %v1249 = vunpack.c.l.b16 %v1217
        %v1250 = vunpack.c.l.b16 %v1218
        %v1251 = vunpack.c.l.b16 %v1219
        %v1252 = vunpack.c.l.b16 %v1220
        %v1253 = vunpack.c.l.b16 %v1221
        %v1254 = vunpack.c.l.b16 %v1222
        %v1255 = vunpack.c.l.b16 %v1223
        %v1256 = vunpack.c.l.b16 %v1224
        %v1257 = vunpack.c.l.b16 %v1225
        %v1258 = vunpack.c.l.b16 %v1226
        %v1259 = vunpack.c.l.b16 %v1227
        %v1260 = vunpack.c.l.b16 %v1228
        %v1261 = vunpack.c.l.b16 %v1229
        %v1262 = vunpack.c.l.b16 %v1230
        %v1263 = vunpack.c.l.b16 %v1231
        %v1264 = vpack.c.b16 %v1249, %v1248
        %v1265 = vpack.c.b16 %v1251, %v1250
        %v1266 = vpack.c.b16 %v1253, %v1252
        %v1267 = vpack.c.b16 %v1255, %v1254
        %v1268 = vpack.c.b16 %v1257, %v1256
        %v1269 = vpack.c.b16 %v1259, %v1258
        %v1270 = vpack.c.b16 %v1261, %v1260
        %v1271 = vpack.c.b16 %v1263, %v1262
        %1280 = vmatpush.bf16.msra.mxu0 %v1271
        %1281 = vmatpush.bf16.msra.mxu0 %v1270
        %1282 = vmatpush.bf16.msra.mxu0 %v1269
        %1283 = vmatpush.bf16.msra.mxu0 %v1268
        %1284 = vmatpush.bf16.msra.mxu0 %v1267
        %1285 = vmatpush.bf16.msra.mxu0 %v1266
        %1286 = vmatpush.bf16.msra.mxu0 %v1265
        %1287 = vmatpush.bf16.msra.mxu0 %v1264
        %1288 = vmatmul.bf16.gmra.mxu0 %v1215
        %v1289 = vpop.f32.mrf.mxu0
        %v1290 = vadd.f32 0.0, %v1289
        %v1291 = vpop.f32.mrf.mxu0
        %v1292 = vadd.f32 0.0, %v1291
        %1293 = vdwg.mxu0
        %v1294 = vadd.f32 %v1101, %v1290
        %v1295 = vadd.f32 %v1102, %v1292
        %v1296 = vld [vmem:[%s703] sm:$0x1]
        %v1298 = vperm.slane %v1296, 0
        %v1300 = vadd.f32 %v1294, %v1298
        %v1301 = vadd.f32 %v1295, %v1298
        %p1302 = scmp.lt.s32.totalorder %s34, 1
        // Predicated region
        $region85: #{tpu_custom_call.1} parent=79 // pred_check
          %p1303 = pneg %p1302
        $region86: #{tpu_custom_call.1} parent=79 // pred_check_branch
          %1305 = sbr.rel (%p1303) target = $region88
        $region87: #{tpu_custom_call.1} parent=79 // pred_region
          %1306 = vst.msk [vmem:[%s651] sm:$0xff] %vm719, %v1300
          %1307 = vst.msk [vmem:[%s651 + $0x8] sm:$0xff] %vm719, %v1301
        $region88: #{tpu_custom_call.1} parent=79 // pred_fallthru
          _
        %p1308 = scmp.eq.s32.totalorder %s34, 1
        // Predicated region
        $region89: #{tpu_custom_call.1} parent=79 // pred_check
          %p1309 = pneg %p1308
        $region90: #{tpu_custom_call.1} parent=79 // pred_check_branch
          %1311 = sbr.rel (%p1309) target = $region92
        $region91: #{tpu_custom_call.1} parent=79 // pred_region
          %v1312 = vld [vmem:[%s13] sm:$0x1]
          %v1313 = vld [vmem:[%s14] sm:$0x1]
          %v1314 = vsel %vm719, %v1300, 0.0
          %1315 = vadd.xlane.f32.xlu0 %v1314
          %v1316 = vpop.xlane.xlu0 %1315
          %v1317 = vsel %vm719, %v1301, 0.0
          %1318 = vadd.xlane.f32.xlu0 %v1317
          %v1319 = vpop.xlane.xlu0 %1318
          %v1320 = vmul.f32 %v1316, %v732
          %v1321 = vmul.f32 %v1319, %v732
          %v1322 = vsub.f32 %v1300, %v1320
          %v1323 = vsub.f32 %v1301, %v1321
          %v1324 = vmul.f32 %v1322, %v1322
          %v1325 = vmul.f32 %v1323, %v1323
          %v1326 = vsel %vm719, %v1324, 0.0
          %1327 = vadd.xlane.f32.xlu0 %v1326
          %v1328 = vpop.xlane.xlu0 %1327
          %v1329 = vsel %vm719, %v1325, 0.0
          %1330 = vadd.xlane.f32.xlu0 %v1329
          %v1331 = vpop.xlane.xlu0 %1330
          %v1332 = vmul.f32 %v1328, %v732
          %v1333 = vmul.f32 %v1331, %v732
          %v1334 = vadd.f32 %v1332, 1e-05
          %v1335 = vadd.f32 %v1333, 1e-05
          %v1336 = vrsqrt.pop %v1334
          %v1337 = vmul.f32 %v1336, %v1334
          %v1338 = vmul.f32 %v1337, %v1336
          %v1339 = vmul.f32 0.5, %v1338
          %v1340 = vsub.f32 1.5, %v1339
          %v1341 = vmul.f32 %v1336, %v1340
          %vm1342 = vweird.f32 %v1334
          %vm1343 = vweird.f32 %v1336
          %vm1344 = vmor %vm1342, %vm1343
          %v1345 = vsel %vm1344, %v1336, %v1341
          %v1346 = vrsqrt.pop %v1335
          %v1347 = vmul.f32 %v1346, %v1335
          %v1348 = vmul.f32 %v1347, %v1346
          %v1349 = vmul.f32 0.5, %v1348
          %v1350 = vsub.f32 1.5, %v1349
          %v1351 = vmul.f32 %v1346, %v1350
          %vm1352 = vweird.f32 %v1335
          %vm1353 = vweird.f32 %v1346
          %vm1354 = vmor %vm1352, %vm1353
          %v1355 = vsel %vm1354, %v1346, %v1351
          %v1356 = vmul.f32 %v1322, %v1345
          %v1357 = vmul.f32 %v1323, %v1355
          %v1359 = vperm.slane %v1312, 0
          %v1361 = vmul.f32 %v1356, %v1359
          %v1362 = vmul.f32 %v1357, %v1359
          %v1364 = vperm.slane %v1313, 0
          %v1366 = vadd.f32 %v1361, %v1364
          %v1367 = vadd.f32 %v1362, %v1364
          %1368 = vst.msk [vmem:[%s651] sm:$0xff] %vm719, %v1366
          %1369 = vst.msk [vmem:[%s651 + $0x8] sm:$0xff] %vm719, %v1367
        $region92: #{tpu_custom_call.1} parent=79 // pred_fallthru
          _
        %s1370 = sand.u32 %s429, 1
        %s1371 = scalar_lea.sflag [#allocation3], %s1370
        %s1372 = sand.u32 %s429, 1
        %s1373 = smul.addr %s1372, 16
        %s1374 = scalar_lea.vmem [#allocation2], %s1373
        // Predicated region
        $region93: #{tpu_custom_call.1} parent=79 // pred_check
          %p1375 = pneg %p439
        $region94: #{tpu_custom_call.1} parent=79 // pred_check_branch
          %1377 = sbr.rel (%p1375) target = $region96
        $region95: #{tpu_custom_call.1} parent=79 // pred_region
          %s1378 = smul.u32 2, %s33
          %1380 = vsyncadd %s1371, 0
          %s1381 = smul.addr %s1378, 8
          %s1382 = scalar_lea.hbm %s15, %s1381
          %s1383 = sshll.u32 %s1374, 4
          %s1384 = int_to_ptr.vmem [resolvable:$true] %s1383
          %s1385 = sshll.u32 %s1382, 4
          %s1386 = int_to_ptr.hbm [resolvable:$true] %s1385
          %1391 = dma.vmem_to_hbm [thread:$0]  %s1384, 256, %s1386, %s1371, 128, 128, 8
        $region96: #{tpu_custom_call.1} parent=79 // pred_fallthru
          _
      $region80: #{tpu_custom_call.1} parent=5 // pred_fallthru
        _
      %p1392 = scmp.le.s32.totalorder 2, %s24
      // Predicated region
      $region97: #{tpu_custom_call.1} parent=5 // pred_check
        %p1393 = pneg %p1392
      $region98: #{tpu_custom_call.1} parent=5 // pred_check_branch
        %1395 = sbr.rel (%p1393) target = $region100
      $region99: #{tpu_custom_call.1} parent=5 // pred_region
        %s1396 = ssub.s32 %s24, 2
        // Predicated region
        $region101: #{tpu_custom_call.1} parent=99 // pred_check
          %p1397 = pneg %p445
        $region102: #{tpu_custom_call.1} parent=99 // pred_check_branch
          %1399 = sbr.rel (%p1397) target = $region104
        $region103: #{tpu_custom_call.1} parent=99 // pred_region
          %s1400 = sand.u32 %s430, 1
          %s1401 = scalar_lea.sflag [#allocation3], %s1400
          %s1402 = sand.u32 %s430, 1
          %s1403 = smul.addr %s1402, 16
          %s1404 = scalar_lea.vmem [#allocation2], %s1403
          %1406 = dma.done %s1401, 256
        $region104: #{tpu_custom_call.1} parent=99 // pred_fallthru
          _
      $region100: #{tpu_custom_call.1} parent=5 // pred_fallthru
        _
    $region6: #{tpu_custom_call.1} parent=1 // loop_footer
      %s28 = sadd.s32 1, %s24
    $region7: #{tpu_custom_call.1} parent=1 // loop_footer_branch
      %23 = sbr.rel target = $region3
    $region8: #{tpu_custom_call.1} parent=1 // loop_exit
      _
    %1407 = vsyncpa [#allocation3], 1
    %s1408 = scalar_lea.sflag [#allocation3], 1
    %1409 = vsyncpa %s1408, 1

</llo_original>
